<compile_context>
chip_gen: v7x
topology: tpu7x:2x2x1
jax: 0.10.0
libtpu: 0.0.40
codegen_flags: <defaults>
</compile_context>

<pallas_src>
import functools

import numpy as np
import jax
import jax.numpy as jnp
from jax.experimental import pallas as pl
from jax.experimental.pallas import tpu as pltpu


def _layer_norm_f32(v, gamma, beta, eps=1e-5):
    """fp32 LayerNorm over the last axis (matches the fp16-safe subclass)."""
    v32 = v.astype(jnp.float32)
    mean = jnp.mean(v32, axis=-1, keepdims=True)
    var = jnp.mean((v32 - mean) ** 2, axis=-1, keepdims=True)
    return (v32 - mean) * jax.lax.rsqrt(var + eps) * gamma + beta


def _residual_block_kernel(
    x_ref, mask_ref,
    ln1_g_ref, ln1_b_ref,
    in_w_ref, in_b_ref,        # in_w: (D, 3D)  pre-transposed, bf16
    out_w_ref, out_b_ref,      # out_w: (D, D)  pre-transposed, bf16
    ln2_g_ref, ln2_b_ref,
    fc_w_ref, fc_b_ref,        # fc_w: (D, 4D)  pre-transposed, bf16
    proj_w_ref, proj_b_ref,    # proj_w: (4D, D) pre-transposed, bf16
    o_ref,
    *, n_head,
):
    x = x_ref[...].astype(jnp.float32)          # (TB, L, D)
    mask = mask_ref[...].astype(jnp.float32)    # (TB, L, L)
    tb, seq, d_model = x.shape
    head_dim = d_model // n_head
    scale = 1.0 / float(head_dim) ** 0.5

    # ---------------- ln_1 (f32) ----------------
    y = _layer_norm_f32(x, ln1_g_ref[0], ln1_b_ref[0])            # (TB, L, D)

    # ------------- fused QKV projection: one bf16 GEMM over TB*L rows -------
    y2 = y.reshape(tb * seq, d_model).astype(jnp.bfloat16)
    qkv = jnp.dot(y2, in_w_ref[...], preferred_element_type=jnp.float32)
    qkv = qkv + in_b_ref[0]                                        # (TB*L, 3D)

    q = (qkv[:, :d_model] * scale).astype(jnp.bfloat16)
    k = qkv[:, d_model:2 * d_model].astype(jnp.bfloat16)
    v = qkv[:, 2 * d_model:].astype(jnp.bfloat16)

    # ------------- multi-head attention, batched over TB per head ----------
    # Output projection is folded into the head loop so no lane-offset concat
    # of head outputs is ever materialized.
    attn = jnp.zeros((tb * seq, d_model), jnp.float32)
    for h in range(n_head):
        lo = h * head_dim
        qh = q[:, lo:lo + head_dim].reshape(tb, seq, head_dim)
        kh = k[:, lo:lo + head_dim].reshape(tb, seq, head_dim)
        vh = v[:, lo:lo + head_dim].reshape(tb, seq, head_dim)

        s = jnp.einsum("bqd,bkd->bqk", qh, kh,
                       preferred_element_type=jnp.float32) + mask   # (TB,L,L)
        s = s - jnp.max(s, axis=-1, keepdims=True)
        p = jnp.exp(s)
        p = p * pl.reciprocal(jnp.sum(p, axis=-1, keepdims=True), approx=True)

        o_h = jnp.einsum("bqk,bkd->bqd", p.astype(jnp.bfloat16), vh,
                         preferred_element_type=jnp.float32)        # (TB,L,hd)

        attn = attn + jnp.dot(
            o_h.reshape(tb * seq, head_dim).astype(jnp.bfloat16),
            out_w_ref[lo:lo + head_dim, :],
            preferred_element_type=jnp.float32)
    attn = attn + out_b_ref[0]

    x = x + attn.reshape(tb, seq, d_model)

    # ---------------- ln_2 + MLP (c_fc -> QuickGELU -> c_proj) --------------
    z = _layer_norm_f32(x, ln2_g_ref[0], ln2_b_ref[0])
    z2 = z.reshape(tb * seq, d_model).astype(jnp.bfloat16)
    h1 = jnp.dot(z2, fc_w_ref[...], preferred_element_type=jnp.float32)
    h1 = h1 + fc_b_ref[0]
    h1 = h1 * jax.nn.sigmoid(1.702 * h1)                            # QuickGELU
    m = jnp.dot(h1.astype(jnp.bfloat16), proj_w_ref[...],
                preferred_element_type=jnp.float32) + proj_b_ref[0]

    o_ref[...] = (x + m.reshape(tb, seq, d_model)).astype(o_ref.dtype)


def _pick_block_batch(n, seq, target_rows=512):
    """Largest TB dividing n with TB*seq <= target_rows (MXU M-fill)."""
    tb = max(1, min(n, target_rows // max(seq, 1)))
    while n % tb:
        tb -= 1
    return tb


def ori_residual_attention_block(x_lnd, attn_mask, params, n_head):
    """x_lnd: (L, N, D) float32; attn_mask: (N, L, L) float32 additive mask.

    `params` uses PyTorch layouts: in_w (3D, D), out_w (D, D), fc_w (4D, D),
    proj_w (D, 4D); biases stored as (1, dim); LN gamma/beta as (1, D).
    """
    L, N, D = x_lnd.shape
    x_nld = jnp.transpose(x_lnd, (1, 0, 2))    # (N, L, D)

    tb = _pick_block_batch(N, L)
    grid = (N // tb,)

    # One-time weight prep (outside the kernel): pre-transpose to
    # (in_features, out_features) and cast to bf16 for the MXU.
    in_w_t = jnp.asarray(params["in_w"].T, jnp.bfloat16)      # (D, 3D)
    out_w_t = jnp.asarray(params["out_w"].T, jnp.bfloat16)    # (D, D)
    fc_w_t = jnp.asarray(params["fc_w"].T, jnp.bfloat16)      # (D, 4D)
    proj_w_t = jnp.asarray(params["proj_w"].T, jnp.bfloat16)  # (4D, D)

    weight_args = (
        params["ln1_g"], params["ln1_b"],
        in_w_t, params["in_b"],
        out_w_t, params["out_b"],
        params["ln2_g"], params["ln2_b"],
        fc_w_t, params["fc_b"],
        proj_w_t, params["proj_b"],
    )

    def full_spec(arr):
        nd = arr.ndim
        return pl.BlockSpec(arr.shape, lambda b, _nd=nd: (0,) * _nd)

    out_nld = pl.pallas_call(
        functools.partial(_residual_block_kernel, n_head=n_head),
        out_shape=jax.ShapeDtypeStruct((N, L, D), x_lnd.dtype),
        grid_spec=pltpu.PrefetchScalarGridSpec(
            num_scalar_prefetch=0,
            grid=grid,
            in_specs=[
                pl.BlockSpec((tb, L, D), lambda b: (b, 0, 0)),
                pl.BlockSpec((tb, L, L), lambda b: (b, 0, 0)),
            ] + [full_spec(a) for a in weight_args],
            out_specs=pl.BlockSpec((tb, L, D), lambda b: (b, 0, 0)),
        ),
        compiler_params=pltpu.CompilerParams(
            dimension_semantics=("parallel",),
            # Explicit scoped-VMEM budget; leaves headroom on v7x (64 MiB
            # physical) while allowing bf16 weights + activations resident.
            vmem_limit_bytes=48 * 1024 * 1024,
        ),
    )(x_nld, attn_mask, *weight_args)

    return jnp.transpose(out_nld, (1, 0, 2)), attn_mask


# ---------------------- pure-JAX reference (for checking) -------------------
def reference_block(x_lnd, attn_mask, params, n_head):
    L, N, D = x_lnd.shape
    hd = D // n_head
    scale = 1.0 / float(hd) ** 0.5

    def ln(v, g, b):
        m = jnp.mean(v, axis=-1, keepdims=True)
        s = jnp.mean((v - m) ** 2, axis=-1, keepdims=True)
        return (v - m) * jax.lax.rsqrt(s + 1e-5) * g[0] + b[0]

    x = jnp.transpose(x_lnd, (1, 0, 2))        # (N, L, D)
    y = ln(x, params["ln1_g"], params["ln1_b"])
    qkv = y @ params["in_w"].T + params["in_b"][0]
    q, k, v = qkv[..., :D] * scale, qkv[..., D:2 * D], qkv[..., 2 * D:]

    def split_heads(t):  # (N, L, D) -> (N, H, L, hd)
        return jnp.transpose(t.reshape(N, L, n_head, hd), (0, 2, 1, 3))

    qh, kh, vh = split_heads(q), split_heads(k), split_heads(v)
    s = jnp.einsum("nhqd,nhkd->nhqk", qh, kh) + attn_mask[:, None, :, :]
    p = jax.nn.softmax(s, axis=-1)
    o = jnp.einsum("nhqk,nhkd->nhqd", p, vh)
    o = jnp.transpose(o, (0, 2, 1, 3)).reshape(N, L, D)
    attn = o @ params["out_w"].T + params["out_b"][0]
    x = x + attn

    z = ln(x, params["ln2_g"], params["ln2_b"])
    h1 = z @ params["fc_w"].T + params["fc_b"][0]
    h1 = h1 * jax.nn.sigmoid(1.702 * h1)
    x = x + (h1 @ params["proj_w"].T + params["proj_b"][0])
    return jnp.transpose(x, (1, 0, 2))


if __name__ == "__main__":
    L, N, D, H = 8, 2, 32, 4     # seq, batch, d_model, n_head

    key = jax.random.PRNGKey(0)
    ks = jax.random.split(key, 12)

    # Parameters in PyTorch layouts (nn.MultiheadAttention / nn.Linear);
    # 1-D params stored as (1, dim) for clean TPU tiling.
    params = {
        "ln1_g": jnp.ones((1, D), jnp.float32),
        "ln1_b": jnp.zeros((1, D), jnp.float32),
        "in_w": jax.random.normal(ks[0], (3 * D, D), jnp.float32) * 0.05,
        "in_b": jax.random.normal(ks[1], (1, 3 * D), jnp.float32) * 0.05,
        "out_w": jax.random.normal(ks[2], (D, D), jnp.float32) * 0.05,
        "out_b": jax.random.normal(ks[3], (1, D), jnp.float32) * 0.05,
        "ln2_g": 1.0 + 0.1 * jax.random.normal(ks[4], (1, D), jnp.float32),
        "ln2_b": 0.1 * jax.random.normal(ks[5], (1, D), jnp.float32),
        "fc_w": jax.random.normal(ks[6], (4 * D, D), jnp.float32) * 0.05,
        "fc_b": jax.random.normal(ks[7], (1, 4 * D), jnp.float32) * 0.05,
        "proj_w": jax.random.normal(ks[8], (D, 4 * D), jnp.float32) * 0.05,
        "proj_b": jax.random.normal(ks[9], (1, D), jnp.float32) * 0.05,
    }

    x = jax.random.normal(ks[10], (L, N, D), jnp.float32)
    # additive float attention mask, one per batch element (causal here)
    causal = jnp.where(
        jnp.arange(L)[:, None] >= jnp.arange(L)[None, :], 0.0, -1e9
    ).astype(jnp.float32)
    attn_mask = jnp.broadcast_to(causal, (N, L, L))

    out, mask_out = ori_residual_attention_block(x, attn_mask, params, H)
    out = jax.block_until_ready(out)

    ref = reference_block(x, attn_mask, params, H)
    # bf16 matmul operands (f32 accumulation) -> looser tolerance than f32.
    np.testing.assert_allclose(np.asarray(out), np.asarray(ref),
                               rtol=3e-2, atol=3e-2)
    assert mask_out.shape == attn_mask.shape

    print("KERNEL_OK")
</pallas_src>

<mosaic_0001>
module attributes {stable_mosaic.version = 11 : i64} {
  func.func @_residual_block_kernel(%arg0: i32, %arg1: memref<2x8x32xf32, #tpu.memory_space<vmem>>, %arg2: memref<2x8x8xf32, #tpu.memory_space<vmem>>, %arg3: memref<1x32xf32, #tpu.memory_space<vmem>>, %arg4: memref<1x32xf32, #tpu.memory_space<vmem>>, %arg5: memref<32x96xbf16, #tpu.memory_space<vmem>>, %arg6: memref<1x96xf32, #tpu.memory_space<vmem>>, %arg7: memref<32x32xbf16, #tpu.memory_space<vmem>>, %arg8: memref<1x32xf32, #tpu.memory_space<vmem>>, %arg9: memref<1x32xf32, #tpu.memory_space<vmem>>, %arg10: memref<1x32xf32, #tpu.memory_space<vmem>>, %arg11: memref<32x128xbf16, #tpu.memory_space<vmem>>, %arg12: memref<1x128xf32, #tpu.memory_space<vmem>>, %arg13: memref<128x32xbf16, #tpu.memory_space<vmem>>, %arg14: memref<1x32xf32, #tpu.memory_space<vmem>>, %arg15: memref<2x8x32xf32, #tpu.memory_space<vmem>>) attributes {dimension_semantics = [#tpu.dimension_semantics<parallel>], iteration_bounds = array<i64: 1>, scalar_prefetch = 0 : i64, scratch_operands = 0 : i64, tpu.core_type = #tpu.core_type<tc>, window_params = [{transform_indices = @transform_0, window_bounds = array<i64: 2, 8, 32>}, {transform_indices = @transform_1, window_bounds = array<i64: 2, 8, 8>}, {pipeline_mode = #tpu.pipeline_mode<synchronous>, transform_indices = @transform_2, window_bounds = array<i64: 1, 32>}, {pipeline_mode = #tpu.pipeline_mode<synchronous>, transform_indices = @transform_3, window_bounds = array<i64: 1, 32>}, {pipeline_mode = #tpu.pipeline_mode<synchronous>, transform_indices = @transform_4, window_bounds = array<i64: 32, 96>}, {pipeline_mode = #tpu.pipeline_mode<synchronous>, transform_indices = @transform_5, window_bounds = array<i64: 1, 96>}, {pipeline_mode = #tpu.pipeline_mode<synchronous>, transform_indices = @transform_6, window_bounds = array<i64: 32, 32>}, {pipeline_mode = #tpu.pipeline_mode<synchronous>, transform_indices = @transform_7, window_bounds = array<i64: 1, 32>}, {pipeline_mode = #tpu.pipeline_mode<synchronous>, transform_indices = @transform_8, window_bounds = array<i64: 1, 32>}, {pipeline_mode = #tpu.pipeline_mode<synchronous>, transform_indices = @transform_9, window_bounds = array<i64: 1, 32>}, {pipeline_mode = #tpu.pipeline_mode<synchronous>, transform_indices = @transform_10, window_bounds = array<i64: 32, 128>}, {pipeline_mode = #tpu.pipeline_mode<synchronous>, transform_indices = @transform_11, window_bounds = array<i64: 1, 128>}, {pipeline_mode = #tpu.pipeline_mode<synchronous>, transform_indices = @transform_12, window_bounds = array<i64: 128, 32>}, {pipeline_mode = #tpu.pipeline_mode<synchronous>, transform_indices = @transform_13, window_bounds = array<i64: 1, 32>}, {transform_indices = @transform_14, window_bounds = array<i64: 2, 8, 32>}]} {
    %c0 = arith.constant 0 : index
    %c0_0 = arith.constant 0 : index
    %c0_1 = arith.constant 0 : index
    %0 = vector.load %arg1[%c0, %c0_0, %c0_1] : memref<2x8x32xf32, #tpu.memory_space<vmem>>, vector<2x8x32xf32>
    %c0_2 = arith.constant 0 : index
    %c0_3 = arith.constant 0 : index
    %c0_4 = arith.constant 0 : index
    %1 = vector.load %arg2[%c0_2, %c0_3, %c0_4] : memref<2x8x8xf32, #tpu.memory_space<vmem>>, vector<2x8x8xf32>
    %c0_5 = arith.constant 0 : index
    %c0_6 = arith.constant 0 : index
    %2 = vector.load %arg3[%c0_5, %c0_6] : memref<1x32xf32, #tpu.memory_space<vmem>>, vector<1x32xf32>
    %3 = vector.shape_cast %2 : vector<1x32xf32> to vector<32xf32>
    %c0_7 = arith.constant 0 : index
    %c0_8 = arith.constant 0 : index
    %4 = vector.load %arg4[%c0_7, %c0_8] : memref<1x32xf32, #tpu.memory_space<vmem>>, vector<1x32xf32>
    %5 = vector.shape_cast %4 : vector<1x32xf32> to vector<32xf32>
    %cst = arith.constant dense<0.000000e+00> : vector<2x8xf32>
    %6 = vector.multi_reduction <add>, %0, %cst [2] : vector<2x8x32xf32> to vector<2x8xf32>
    %7 = vector.shape_cast %6 : vector<2x8xf32> to vector<2x8x1xf32>
    %cst_9 = arith.constant 3.200000e+01 : f32
    %8 = vector.broadcast %cst_9 : f32 to vector<2x8x1xf32>
    %9 = arith.divf %7, %8 : vector<2x8x1xf32>
    %10 = vector.broadcast %9 : vector<2x8x1xf32> to vector<2x8x32xf32>
    %11 = arith.subf %0, %10 : vector<2x8x32xf32>
    %12 = arith.mulf %11, %11 : vector<2x8x32xf32>
    %cst_10 = arith.constant dense<0.000000e+00> : vector<2x8xf32>
    %13 = vector.multi_reduction <add>, %12, %cst_10 [2] : vector<2x8x32xf32> to vector<2x8xf32>
    %14 = vector.shape_cast %13 : vector<2x8xf32> to vector<2x8x1xf32>
    %cst_11 = arith.constant 3.200000e+01 : f32
    %15 = vector.broadcast %cst_11 : f32 to vector<2x8x1xf32>
    %16 = arith.divf %14, %15 : vector<2x8x1xf32>
    %17 = vector.broadcast %9 : vector<2x8x1xf32> to vector<2x8x32xf32>
    %18 = arith.subf %0, %17 : vector<2x8x32xf32>
    %cst_12 = arith.constant 9.99999974E-6 : f32
    %19 = vector.broadcast %cst_12 : f32 to vector<2x8x1xf32>
    %20 = arith.addf %16, %19 : vector<2x8x1xf32>
    %21 = math.rsqrt %20 : vector<2x8x1xf32>
    %22 = vector.broadcast %21 : vector<2x8x1xf32> to vector<2x8x32xf32>
    %23 = arith.mulf %18, %22 : vector<2x8x32xf32>
    %24 = vector.shape_cast %3 : vector<32xf32> to vector<1x1x32xf32>
    %25 = vector.broadcast %24 : vector<1x1x32xf32> to vector<2x8x32xf32>
    %26 = arith.mulf %23, %25 : vector<2x8x32xf32>
    %27 = vector.shape_cast %5 : vector<32xf32> to vector<1x1x32xf32>
    %28 = vector.broadcast %27 : vector<1x1x32xf32> to vector<2x8x32xf32>
    %29 = arith.addf %26, %28 : vector<2x8x32xf32>
    %30 = vector.shape_cast %29 : vector<2x8x32xf32> to vector<16x32xf32>
    %31 = arith.truncf %30 : vector<16x32xf32> to vector<16x32xbf16>
    %c0_13 = arith.constant 0 : index
    %c0_14 = arith.constant 0 : index
    %32 = vector.load %arg5[%c0_13, %c0_14] : memref<32x96xbf16, #tpu.memory_space<vmem>>, vector<32x96xbf16>
    %cst_15 = arith.constant dense<0.000000e+00> : vector<16x96xf32>
    %33 = tpu.matmul %31, %32, %cst_15 {dimension_numbers = #tpu.dot_dimension_numbers<[1], [0], [0], [1], [0, 0, 1, 1], [], []>} : vector<16x32xbf16>, vector<32x96xbf16>, vector<16x96xf32> -> vector<16x96xf32>
    %c0_16 = arith.constant 0 : index
    %c0_17 = arith.constant 0 : index
    %34 = vector.load %arg6[%c0_16, %c0_17] : memref<1x96xf32, #tpu.memory_space<vmem>>, vector<1x96xf32>
    %35 = vector.shape_cast %34 : vector<1x96xf32> to vector<96xf32>
    %36 = vector.shape_cast %35 : vector<96xf32> to vector<1x96xf32>
    %37 = vector.broadcast %36 : vector<1x96xf32> to vector<16x96xf32>
    %38 = arith.addf %33, %37 : vector<16x96xf32>
    %39 = vector.extract_strided_slice %38 {offsets = [0, 0], sizes = [16, 32], strides = [1, 1]} : vector<16x96xf32> to vector<16x32xf32>
    %cst_18 = arith.constant 0.353553385 : f32
    %40 = vector.broadcast %cst_18 : f32 to vector<16x32xf32>
    %41 = arith.mulf %39, %40 : vector<16x32xf32>
    %42 = arith.truncf %41 : vector<16x32xf32> to vector<16x32xbf16>
    %43 = vector.extract_strided_slice %38 {offsets = [0, 32], sizes = [16, 32], strides = [1, 1]} : vector<16x96xf32> to vector<16x32xf32>
    %44 = arith.truncf %43 : vector<16x32xf32> to vector<16x32xbf16>
    %45 = vector.extract_strided_slice %38 {offsets = [0, 64], sizes = [16, 32], strides = [1, 1]} : vector<16x96xf32> to vector<16x32xf32>
    %46 = arith.truncf %45 : vector<16x32xf32> to vector<16x32xbf16>
    %cst_19 = arith.constant 0.000000e+00 : f32
    %47 = vector.broadcast %cst_19 : f32 to vector<16x32xf32>
    %48 = vector.extract_strided_slice %42 {offsets = [0, 0], sizes = [16, 8], strides = [1, 1]} : vector<16x32xbf16> to vector<16x8xbf16>
    %49 = vector.shape_cast %48 : vector<16x8xbf16> to vector<2x8x8xbf16>
    %50 = vector.extract_strided_slice %44 {offsets = [0, 0], sizes = [16, 8], strides = [1, 1]} : vector<16x32xbf16> to vector<16x8xbf16>
    %51 = vector.shape_cast %50 : vector<16x8xbf16> to vector<2x8x8xbf16>
    %52 = vector.extract_strided_slice %46 {offsets = [0, 0], sizes = [16, 8], strides = [1, 1]} : vector<16x32xbf16> to vector<16x8xbf16>
    %53 = vector.shape_cast %52 : vector<16x8xbf16> to vector<2x8x8xbf16>
    "tpu.trace_start"() <{level = 10 : i32, message = "bqd,bkd->bqk"}> : () -> ()
    %cst_20 = arith.constant dense<0.000000e+00> : vector<2x8x8xf32>
    %54 = tpu.matmul %49, %51, %cst_20 {dimension_numbers = #tpu.dot_dimension_numbers<[2], [2], [1], [1], [0, 0, 0, 1, 1, 1], [0], [0]>} : vector<2x8x8xbf16>, vector<2x8x8xbf16>, vector<2x8x8xf32> -> vector<2x8x8xf32>
    "tpu.trace_stop"() : () -> ()
    %55 = arith.addf %54, %1 : vector<2x8x8xf32>
    %cst_21 = arith.constant dense<0xFF800000> : vector<2x8xf32>
    %56 = vector.multi_reduction <maximumf>, %55, %cst_21 [2] : vector<2x8x8xf32> to vector<2x8xf32>
    %57 = vector.shape_cast %56 : vector<2x8xf32> to vector<2x8x1xf32>
    %58 = vector.broadcast %57 : vector<2x8x1xf32> to vector<2x8x8xf32>
    %59 = arith.subf %55, %58 : vector<2x8x8xf32>
    %60 = math.exp %59 : vector<2x8x8xf32>
    %cst_22 = arith.constant dense<0.000000e+00> : vector<2x8xf32>
    %61 = vector.multi_reduction <add>, %60, %cst_22 [2] : vector<2x8x8xf32> to vector<2x8xf32>
    %62 = vector.shape_cast %61 : vector<2x8xf32> to vector<2x8x1xf32>
    %63 = tpu.reciprocal %62 {approx = true} : vector<2x8x1xf32> -> vector<2x8x1xf32>
    %64 = vector.broadcast %63 : vector<2x8x1xf32> to vector<2x8x8xf32>
    %65 = arith.mulf %60, %64 : vector<2x8x8xf32>
    %66 = arith.truncf %65 : vector<2x8x8xf32> to vector<2x8x8xbf16>
    "tpu.trace_start"() <{level = 10 : i32, message = "bqk,bkd->bqd"}> : () -> ()
    %cst_23 = arith.constant dense<0.000000e+00> : vector<2x8x8xf32>
    %67 = tpu.matmul %66, %53, %cst_23 {dimension_numbers = #tpu.dot_dimension_numbers<[2], [1], [1], [2], [0, 0, 0, 1, 1, 2], [0], [0]>} : vector<2x8x8xbf16>, vector<2x8x8xbf16>, vector<2x8x8xf32> -> vector<2x8x8xf32>
    "tpu.trace_stop"() : () -> ()
    %68 = vector.shape_cast %67 : vector<2x8x8xf32> to vector<16x8xf32>
    %69 = arith.truncf %68 : vector<16x8xf32> to vector<16x8xbf16>
    %c0_24 = arith.constant 0 : index
    %c0_25 = arith.constant 0 : index
    %70 = vector.load %arg7[%c0_24, %c0_25] : memref<32x32xbf16, #tpu.memory_space<vmem>>, vector<8x32xbf16>
    %cst_26 = arith.constant dense<0.000000e+00> : vector<16x32xf32>
    %71 = tpu.matmul %69, %70, %cst_26 {dimension_numbers = #tpu.dot_dimension_numbers<[1], [0], [0], [1], [0, 0, 1, 1], [], []>} : vector<16x8xbf16>, vector<8x32xbf16>, vector<16x32xf32> -> vector<16x32xf32>
    %72 = arith.addf %47, %71 : vector<16x32xf32>
    %73 = vector.extract_strided_slice %42 {offsets = [0, 8], sizes = [16, 8], strides = [1, 1]} : vector<16x32xbf16> to vector<16x8xbf16>
    %74 = vector.shape_cast %73 : vector<16x8xbf16> to vector<2x8x8xbf16>
    %75 = vector.extract_strided_slice %44 {offsets = [0, 8], sizes = [16, 8], strides = [1, 1]} : vector<16x32xbf16> to vector<16x8xbf16>
    %76 = vector.shape_cast %75 : vector<16x8xbf16> to vector<2x8x8xbf16>
    %77 = vector.extract_strided_slice %46 {offsets = [0, 8], sizes = [16, 8], strides = [1, 1]} : vector<16x32xbf16> to vector<16x8xbf16>
    %78 = vector.shape_cast %77 : vector<16x8xbf16> to vector<2x8x8xbf16>
    "tpu.trace_start"() <{level = 10 : i32, message = "bqd,bkd->bqk"}> : () -> ()
    %cst_27 = arith.constant dense<0.000000e+00> : vector<2x8x8xf32>
    %79 = tpu.matmul %74, %76, %cst_27 {dimension_numbers = #tpu.dot_dimension_numbers<[2], [2], [1], [1], [0, 0, 0, 1, 1, 1], [0], [0]>} : vector<2x8x8xbf16>, vector<2x8x8xbf16>, vector<2x8x8xf32> -> vector<2x8x8xf32>
    "tpu.trace_stop"() : () -> ()
    %80 = arith.addf %79, %1 : vector<2x8x8xf32>
    %cst_28 = arith.constant dense<0xFF800000> : vector<2x8xf32>
    %81 = vector.multi_reduction <maximumf>, %80, %cst_28 [2] : vector<2x8x8xf32> to vector<2x8xf32>
    %82 = vector.shape_cast %81 : vector<2x8xf32> to vector<2x8x1xf32>
    %83 = vector.broadcast %82 : vector<2x8x1xf32> to vector<2x8x8xf32>
    %84 = arith.subf %80, %83 : vector<2x8x8xf32>
    %85 = math.exp %84 : vector<2x8x8xf32>
    %cst_29 = arith.constant dense<0.000000e+00> : vector<2x8xf32>
    %86 = vector.multi_reduction <add>, %85, %cst_29 [2] : vector<2x8x8xf32> to vector<2x8xf32>
    %87 = vector.shape_cast %86 : vector<2x8xf32> to vector<2x8x1xf32>
    %88 = tpu.reciprocal %87 {approx = true} : vector<2x8x1xf32> -> vector<2x8x1xf32>
    %89 = vector.broadcast %88 : vector<2x8x1xf32> to vector<2x8x8xf32>
    %90 = arith.mulf %85, %89 : vector<2x8x8xf32>
    %91 = arith.truncf %90 : vector<2x8x8xf32> to vector<2x8x8xbf16>
    "tpu.trace_start"() <{level = 10 : i32, message = "bqk,bkd->bqd"}> : () -> ()
    %cst_30 = arith.constant dense<0.000000e+00> : vector<2x8x8xf32>
    %92 = tpu.matmul %91, %78, %cst_30 {dimension_numbers = #tpu.dot_dimension_numbers<[2], [1], [1], [2], [0, 0, 0, 1, 1, 2], [0], [0]>} : vector<2x8x8xbf16>, vector<2x8x8xbf16>, vector<2x8x8xf32> -> vector<2x8x8xf32>
    "tpu.trace_stop"() : () -> ()
    %93 = vector.shape_cast %92 : vector<2x8x8xf32> to vector<16x8xf32>
    %94 = arith.truncf %93 : vector<16x8xf32> to vector<16x8xbf16>
    %c8 = arith.constant 8 : index
    %c0_31 = arith.constant 0 : index
    %95 = vector.load %arg7[%c8, %c0_31] : memref<32x32xbf16, #tpu.memory_space<vmem>>, vector<8x32xbf16>
    %cst_32 = arith.constant dense<0.000000e+00> : vector<16x32xf32>
    %96 = tpu.matmul %94, %95, %cst_32 {dimension_numbers = #tpu.dot_dimension_numbers<[1], [0], [0], [1], [0, 0, 1, 1], [], []>} : vector<16x8xbf16>, vector<8x32xbf16>, vector<16x32xf32> -> vector<16x32xf32>
    %97 = arith.addf %72, %96 : vector<16x32xf32>
    %98 = vector.extract_strided_slice %42 {offsets = [0, 16], sizes = [16, 8], strides = [1, 1]} : vector<16x32xbf16> to vector<16x8xbf16>
    %99 = vector.shape_cast %98 : vector<16x8xbf16> to vector<2x8x8xbf16>
    %100 = vector.extract_strided_slice %44 {offsets = [0, 16], sizes = [16, 8], strides = [1, 1]} : vector<16x32xbf16> to vector<16x8xbf16>
    %101 = vector.shape_cast %100 : vector<16x8xbf16> to vector<2x8x8xbf16>
    %102 = vector.extract_strided_slice %46 {offsets = [0, 16], sizes = [16, 8], strides = [1, 1]} : vector<16x32xbf16> to vector<16x8xbf16>
    %103 = vector.shape_cast %102 : vector<16x8xbf16> to vector<2x8x8xbf16>
    "tpu.trace_start"() <{level = 10 : i32, message = "bqd,bkd->bqk"}> : () -> ()
    %cst_33 = arith.constant dense<0.000000e+00> : vector<2x8x8xf32>
    %104 = tpu.matmul %99, %101, %cst_33 {dimension_numbers = #tpu.dot_dimension_numbers<[2], [2], [1], [1], [0, 0, 0, 1, 1, 1], [0], [0]>} : vector<2x8x8xbf16>, vector<2x8x8xbf16>, vector<2x8x8xf32> -> vector<2x8x8xf32>
    "tpu.trace_stop"() : () -> ()
    %105 = arith.addf %104, %1 : vector<2x8x8xf32>
    %cst_34 = arith.constant dense<0xFF800000> : vector<2x8xf32>
    %106 = vector.multi_reduction <maximumf>, %105, %cst_34 [2] : vector<2x8x8xf32> to vector<2x8xf32>
    %107 = vector.shape_cast %106 : vector<2x8xf32> to vector<2x8x1xf32>
    %108 = vector.broadcast %107 : vector<2x8x1xf32> to vector<2x8x8xf32>
    %109 = arith.subf %105, %108 : vector<2x8x8xf32>
    %110 = math.exp %109 : vector<2x8x8xf32>
    %cst_35 = arith.constant dense<0.000000e+00> : vector<2x8xf32>
    %111 = vector.multi_reduction <add>, %110, %cst_35 [2] : vector<2x8x8xf32> to vector<2x8xf32>
    %112 = vector.shape_cast %111 : vector<2x8xf32> to vector<2x8x1xf32>
    %113 = tpu.reciprocal %112 {approx = true} : vector<2x8x1xf32> -> vector<2x8x1xf32>
    %114 = vector.broadcast %113 : vector<2x8x1xf32> to vector<2x8x8xf32>
    %115 = arith.mulf %110, %114 : vector<2x8x8xf32>
    %116 = arith.truncf %115 : vector<2x8x8xf32> to vector<2x8x8xbf16>
    "tpu.trace_start"() <{level = 10 : i32, message = "bqk,bkd->bqd"}> : () -> ()
    %cst_36 = arith.constant dense<0.000000e+00> : vector<2x8x8xf32>
    %117 = tpu.matmul %116, %103, %cst_36 {dimension_numbers = #tpu.dot_dimension_numbers<[2], [1], [1], [2], [0, 0, 0, 1, 1, 2], [0], [0]>} : vector<2x8x8xbf16>, vector<2x8x8xbf16>, vector<2x8x8xf32> -> vector<2x8x8xf32>
    "tpu.trace_stop"() : () -> ()
    %118 = vector.shape_cast %117 : vector<2x8x8xf32> to vector<16x8xf32>
    %119 = arith.truncf %118 : vector<16x8xf32> to vector<16x8xbf16>
    %c16 = arith.constant 16 : index
    %c0_37 = arith.constant 0 : index
    %120 = vector.load %arg7[%c16, %c0_37] : memref<32x32xbf16, #tpu.memory_space<vmem>>, vector<8x32xbf16>
    %cst_38 = arith.constant dense<0.000000e+00> : vector<16x32xf32>
    %121 = tpu.matmul %119, %120, %cst_38 {dimension_numbers = #tpu.dot_dimension_numbers<[1], [0], [0], [1], [0, 0, 1, 1], [], []>} : vector<16x8xbf16>, vector<8x32xbf16>, vector<16x32xf32> -> vector<16x32xf32>
    %122 = arith.addf %97, %121 : vector<16x32xf32>
    %123 = vector.extract_strided_slice %42 {offsets = [0, 24], sizes = [16, 8], strides = [1, 1]} : vector<16x32xbf16> to vector<16x8xbf16>
    %124 = vector.shape_cast %123 : vector<16x8xbf16> to vector<2x8x8xbf16>
    %125 = vector.extract_strided_slice %44 {offsets = [0, 24], sizes = [16, 8], strides = [1, 1]} : vector<16x32xbf16> to vector<16x8xbf16>
    %126 = vector.shape_cast %125 : vector<16x8xbf16> to vector<2x8x8xbf16>
    %127 = vector.extract_strided_slice %46 {offsets = [0, 24], sizes = [16, 8], strides = [1, 1]} : vector<16x32xbf16> to vector<16x8xbf16>
    %128 = vector.shape_cast %127 : vector<16x8xbf16> to vector<2x8x8xbf16>
    "tpu.trace_start"() <{level = 10 : i32, message = "bqd,bkd->bqk"}> : () -> ()
    %cst_39 = arith.constant dense<0.000000e+00> : vector<2x8x8xf32>
    %129 = tpu.matmul %124, %126, %cst_39 {dimension_numbers = #tpu.dot_dimension_numbers<[2], [2], [1], [1], [0, 0, 0, 1, 1, 1], [0], [0]>} : vector<2x8x8xbf16>, vector<2x8x8xbf16>, vector<2x8x8xf32> -> vector<2x8x8xf32>
    "tpu.trace_stop"() : () -> ()
    %130 = arith.addf %129, %1 : vector<2x8x8xf32>
    %cst_40 = arith.constant dense<0xFF800000> : vector<2x8xf32>
    %131 = vector.multi_reduction <maximumf>, %130, %cst_40 [2] : vector<2x8x8xf32> to vector<2x8xf32>
    %132 = vector.shape_cast %131 : vector<2x8xf32> to vector<2x8x1xf32>
    %133 = vector.broadcast %132 : vector<2x8x1xf32> to vector<2x8x8xf32>
    %134 = arith.subf %130, %133 : vector<2x8x8xf32>
    %135 = math.exp %134 : vector<2x8x8xf32>
    %cst_41 = arith.constant dense<0.000000e+00> : vector<2x8xf32>
    %136 = vector.multi_reduction <add>, %135, %cst_41 [2] : vector<2x8x8xf32> to vector<2x8xf32>
    %137 = vector.shape_cast %136 : vector<2x8xf32> to vector<2x8x1xf32>
    %138 = tpu.reciprocal %137 {approx = true} : vector<2x8x1xf32> -> vector<2x8x1xf32>
    %139 = vector.broadcast %138 : vector<2x8x1xf32> to vector<2x8x8xf32>
    %140 = arith.mulf %135, %139 : vector<2x8x8xf32>
    %141 = arith.truncf %140 : vector<2x8x8xf32> to vector<2x8x8xbf16>
    "tpu.trace_start"() <{level = 10 : i32, message = "bqk,bkd->bqd"}> : () -> ()
    %cst_42 = arith.constant dense<0.000000e+00> : vector<2x8x8xf32>
    %142 = tpu.matmul %141, %128, %cst_42 {dimension_numbers = #tpu.dot_dimension_numbers<[2], [1], [1], [2], [0, 0, 0, 1, 1, 2], [0], [0]>} : vector<2x8x8xbf16>, vector<2x8x8xbf16>, vector<2x8x8xf32> -> vector<2x8x8xf32>
    "tpu.trace_stop"() : () -> ()
    %143 = vector.shape_cast %142 : vector<2x8x8xf32> to vector<16x8xf32>
    %144 = arith.truncf %143 : vector<16x8xf32> to vector<16x8xbf16>
    %c24 = arith.constant 24 : index
    %c0_43 = arith.constant 0 : index
    %145 = vector.load %arg7[%c24, %c0_43] : memref<32x32xbf16, #tpu.memory_space<vmem>>, vector<8x32xbf16>
    %cst_44 = arith.constant dense<0.000000e+00> : vector<16x32xf32>
    %146 = tpu.matmul %144, %145, %cst_44 {dimension_numbers = #tpu.dot_dimension_numbers<[1], [0], [0], [1], [0, 0, 1, 1], [], []>} : vector<16x8xbf16>, vector<8x32xbf16>, vector<16x32xf32> -> vector<16x32xf32>
    %147 = arith.addf %122, %146 : vector<16x32xf32>
    %c0_45 = arith.constant 0 : index
    %c0_46 = arith.constant 0 : index
    %148 = vector.load %arg8[%c0_45, %c0_46] : memref<1x32xf32, #tpu.memory_space<vmem>>, vector<1x32xf32>
    %149 = vector.shape_cast %148 : vector<1x32xf32> to vector<32xf32>
    %150 = vector.shape_cast %149 : vector<32xf32> to vector<1x32xf32>
    %151 = vector.broadcast %150 : vector<1x32xf32> to vector<16x32xf32>
    %152 = arith.addf %147, %151 : vector<16x32xf32>
    %153 = vector.shape_cast %152 : vector<16x32xf32> to vector<2x8x32xf32>
    %154 = arith.addf %0, %153 : vector<2x8x32xf32>
    %c0_47 = arith.constant 0 : index
    %c0_48 = arith.constant 0 : index
    %155 = vector.load %arg9[%c0_47, %c0_48] : memref<1x32xf32, #tpu.memory_space<vmem>>, vector<1x32xf32>
    %156 = vector.shape_cast %155 : vector<1x32xf32> to vector<32xf32>
    %c0_49 = arith.constant 0 : index
    %c0_50 = arith.constant 0 : index
    %157 = vector.load %arg10[%c0_49, %c0_50] : memref<1x32xf32, #tpu.memory_space<vmem>>, vector<1x32xf32>
    %158 = vector.shape_cast %157 : vector<1x32xf32> to vector<32xf32>
    %cst_51 = arith.constant dense<0.000000e+00> : vector<2x8xf32>
    %159 = vector.multi_reduction <add>, %154, %cst_51 [2] : vector<2x8x32xf32> to vector<2x8xf32>
    %160 = vector.shape_cast %159 : vector<2x8xf32> to vector<2x8x1xf32>
    %cst_52 = arith.constant 3.200000e+01 : f32
    %161 = vector.broadcast %cst_52 : f32 to vector<2x8x1xf32>
    %162 = arith.divf %160, %161 : vector<2x8x1xf32>
    %163 = vector.broadcast %162 : vector<2x8x1xf32> to vector<2x8x32xf32>
    %164 = arith.subf %154, %163 : vector<2x8x32xf32>
    %165 = arith.mulf %164, %164 : vector<2x8x32xf32>
    %cst_53 = arith.constant dense<0.000000e+00> : vector<2x8xf32>
    %166 = vector.multi_reduction <add>, %165, %cst_53 [2] : vector<2x8x32xf32> to vector<2x8xf32>
    %167 = vector.shape_cast %166 : vector<2x8xf32> to vector<2x8x1xf32>
    %cst_54 = arith.constant 3.200000e+01 : f32
    %168 = vector.broadcast %cst_54 : f32 to vector<2x8x1xf32>
    %169 = arith.divf %167, %168 : vector<2x8x1xf32>
    %170 = vector.broadcast %162 : vector<2x8x1xf32> to vector<2x8x32xf32>
    %171 = arith.subf %154, %170 : vector<2x8x32xf32>
    %cst_55 = arith.constant 9.99999974E-6 : f32
    %172 = vector.broadcast %cst_55 : f32 to vector<2x8x1xf32>
    %173 = arith.addf %169, %172 : vector<2x8x1xf32>
    %174 = math.rsqrt %173 : vector<2x8x1xf32>
    %175 = vector.broadcast %174 : vector<2x8x1xf32> to vector<2x8x32xf32>
    %176 = arith.mulf %171, %175 : vector<2x8x32xf32>
    %177 = vector.shape_cast %156 : vector<32xf32> to vector<1x1x32xf32>
    %178 = vector.broadcast %177 : vector<1x1x32xf32> to vector<2x8x32xf32>
    %179 = arith.mulf %176, %178 : vector<2x8x32xf32>
    %180 = vector.shape_cast %158 : vector<32xf32> to vector<1x1x32xf32>
    %181 = vector.broadcast %180 : vector<1x1x32xf32> to vector<2x8x32xf32>
    %182 = arith.addf %179, %181 : vector<2x8x32xf32>
    %183 = vector.shape_cast %182 : vector<2x8x32xf32> to vector<16x32xf32>
    %184 = arith.truncf %183 : vector<16x32xf32> to vector<16x32xbf16>
    %c0_56 = arith.constant 0 : index
    %c0_57 = arith.constant 0 : index
    %185 = vector.load %arg11[%c0_56, %c0_57] : memref<32x128xbf16, #tpu.memory_space<vmem>>, vector<32x128xbf16>
    %cst_58 = arith.constant dense<0.000000e+00> : vector<16x128xf32>
    %186 = tpu.matmul %184, %185, %cst_58 {dimension_numbers = #tpu.dot_dimension_numbers<[1], [0], [0], [1], [0, 0, 1, 1], [], []>} : vector<16x32xbf16>, vector<32x128xbf16>, vector<16x128xf32> -> vector<16x128xf32>
    %c0_59 = arith.constant 0 : index
    %c0_60 = arith.constant 0 : index
    %187 = vector.load %arg12[%c0_59, %c0_60] : memref<1x128xf32, #tpu.memory_space<vmem>>, vector<1x128xf32>
    %188 = vector.shape_cast %187 : vector<1x128xf32> to vector<128xf32>
    %189 = vector.shape_cast %188 : vector<128xf32> to vector<1x128xf32>
    %190 = vector.broadcast %189 : vector<1x128xf32> to vector<16x128xf32>
    %191 = arith.addf %186, %190 : vector<16x128xf32>
    %cst_61 = arith.constant 1.702000e+00 : f32
    %192 = vector.broadcast %cst_61 : f32 to vector<16x128xf32>
    %193 = arith.mulf %192, %191 : vector<16x128xf32>
    %194 = arith.negf %193 : vector<16x128xf32>
    %195 = math.exp %194 : vector<16x128xf32>
    %cst_62 = arith.constant 1.000000e+00 : f32
    %196 = vector.broadcast %cst_62 : f32 to vector<16x128xf32>
    %197 = arith.addf %196, %195 : vector<16x128xf32>
    %198 = arith.divf %196, %197 : vector<16x128xf32>
    %199 = arith.mulf %191, %198 : vector<16x128xf32>
    %200 = arith.truncf %199 : vector<16x128xf32> to vector<16x128xbf16>
    %c0_63 = arith.constant 0 : index
    %c0_64 = arith.constant 0 : index
    %201 = vector.load %arg13[%c0_63, %c0_64] : memref<128x32xbf16, #tpu.memory_space<vmem>>, vector<128x32xbf16>
    %cst_65 = arith.constant dense<0.000000e+00> : vector<16x32xf32>
    %202 = tpu.matmul %200, %201, %cst_65 {dimension_numbers = #tpu.dot_dimension_numbers<[1], [0], [0], [1], [0, 0, 1, 1], [], []>} : vector<16x128xbf16>, vector<128x32xbf16>, vector<16x32xf32> -> vector<16x32xf32>
    %c0_66 = arith.constant 0 : index
    %c0_67 = arith.constant 0 : index
    %203 = vector.load %arg14[%c0_66, %c0_67] : memref<1x32xf32, #tpu.memory_space<vmem>>, vector<1x32xf32>
    %204 = vector.shape_cast %203 : vector<1x32xf32> to vector<32xf32>
    %205 = vector.shape_cast %204 : vector<32xf32> to vector<1x32xf32>
    %206 = vector.broadcast %205 : vector<1x32xf32> to vector<16x32xf32>
    %207 = arith.addf %202, %206 : vector<16x32xf32>
    %208 = vector.shape_cast %207 : vector<16x32xf32> to vector<2x8x32xf32>
    %209 = arith.addf %154, %208 : vector<2x8x32xf32>
    %c0_68 = arith.constant 0 : index
    %c0_69 = arith.constant 0 : index
    %c0_70 = arith.constant 0 : index
    %210 = vector.load %arg15[%c0_68, %c0_69, %c0_70] : memref<2x8x32xf32, #tpu.memory_space<vmem>>, vector<2x8x32xf32>
    tpu.vector_store %arg15[%c0_68, %c0_69, %c0_70], %209 {strides = array<i32>} : memref<2x8x32xf32, #tpu.memory_space<vmem>>, vector<2x8x32xf32>,
    return
  }
  func.func @transform_0(%arg0: i32) -> (i32, i32, i32) {
    %c0_i32 = arith.constant 0 : i32
    %c0_i32_0 = arith.constant 0 : i32
    %c0_i32_1 = arith.constant 0 : i32
    return %arg0, %c0_i32, %c0_i32_0 : i32, i32, i32
  }
  func.func @transform_1(%arg0: i32) -> (i32, i32, i32) {
    %c0_i32 = arith.constant 0 : i32
    %c0_i32_0 = arith.constant 0 : i32
    %c0_i32_1 = arith.constant 0 : i32
    return %arg0, %c0_i32, %c0_i32_0 : i32, i32, i32
  }
  func.func @transform_2(%arg0: i32) -> (i32, i32) {
    %c0_i32 = arith.constant 0 : i32
    %c0_i32_0 = arith.constant 0 : i32
    %c0_i32_1 = arith.constant 0 : i32
    return %c0_i32, %c0_i32_0 : i32, i32
  }
  func.func @transform_3(%arg0: i32) -> (i32, i32) {
    %c0_i32 = arith.constant 0 : i32
    %c0_i32_0 = arith.constant 0 : i32
    %c0_i32_1 = arith.constant 0 : i32
    return %c0_i32, %c0_i32_0 : i32, i32
  }
  func.func @transform_4(%arg0: i32) -> (i32, i32) {
    %c0_i32 = arith.constant 0 : i32
    %c0_i32_0 = arith.constant 0 : i32
    %c0_i32_1 = arith.constant 0 : i32
    return %c0_i32, %c0_i32_0 : i32, i32
  }
  func.func @transform_5(%arg0: i32) -> (i32, i32) {
    %c0_i32 = arith.constant 0 : i32
    %c0_i32_0 = arith.constant 0 : i32
    %c0_i32_1 = arith.constant 0 : i32
    return %c0_i32, %c0_i32_0 : i32, i32
  }
  func.func @transform_6(%arg0: i32) -> (i32, i32) {
    %c0_i32 = arith.constant 0 : i32
    %c0_i32_0 = arith.constant 0 : i32
    %c0_i32_1 = arith.constant 0 : i32
    return %c0_i32, %c0_i32_0 : i32, i32
  }
  func.func @transform_7(%arg0: i32) -> (i32, i32) {
    %c0_i32 = arith.constant 0 : i32
    %c0_i32_0 = arith.constant 0 : i32
    %c0_i32_1 = arith.constant 0 : i32
    return %c0_i32, %c0_i32_0 : i32, i32
  }
  func.func @transform_8(%arg0: i32) -> (i32, i32) {
    %c0_i32 = arith.constant 0 : i32
    %c0_i32_0 = arith.constant 0 : i32
    %c0_i32_1 = arith.constant 0 : i32
    return %c0_i32, %c0_i32_0 : i32, i32
  }
  func.func @transform_9(%arg0: i32) -> (i32, i32) {
    %c0_i32 = arith.constant 0 : i32
    %c0_i32_0 = arith.constant 0 : i32
    %c0_i32_1 = arith.constant 0 : i32
    return %c0_i32, %c0_i32_0 : i32, i32
  }
  func.func @transform_10(%arg0: i32) -> (i32, i32) {
    %c0_i32 = arith.constant 0 : i32
    %c0_i32_0 = arith.constant 0 : i32
    %c0_i32_1 = arith.constant 0 : i32
    return %c0_i32, %c0_i32_0 : i32, i32
  }
  func.func @transform_11(%arg0: i32) -> (i32, i32) {
    %c0_i32 = arith.constant 0 : i32
    %c0_i32_0 = arith.constant 0 : i32
    %c0_i32_1 = arith.constant 0 : i32
    return %c0_i32, %c0_i32_0 : i32, i32
  }
  func.func @transform_12(%arg0: i32) -> (i32, i32) {
    %c0_i32 = arith.constant 0 : i32
    %c0_i32_0 = arith.constant 0 : i32
    %c0_i32_1 = arith.constant 0 : i32
    return %c0_i32, %c0_i32_0 : i32, i32
  }
  func.func @transform_13(%arg0: i32) -> (i32, i32) {
    %c0_i32 = arith.constant 0 : i32
    %c0_i32_0 = arith.constant 0 : i32
    %c0_i32_1 = arith.constant 0 : i32
    return %c0_i32, %c0_i32_0 : i32, i32
  }
  func.func @transform_14(%arg0: i32) -> (i32, i32, i32) {
    %c0_i32 = arith.constant 0 : i32
    %c0_i32_0 = arith.constant 0 : i32
    %c0_i32_1 = arith.constant 0 : i32
    return %arg0, %c0_i32, %c0_i32_0 : i32, i32, i32
  }
}

</mosaic_0001>

<llo_original>
// kernel: tpu_custom_call.1
$region0: #{tpu_custom_call.1}
  #allocation0 [shape = 'u32[]', space=smem, size = 0x4, offset = 0x4, fixed_abs, tag = 'smem constant byte address 0x4 - core index']
  #allocation1 [shape = 'u32[144,128]{1,0:T(1,128)}', space=vmem, size = 0x12000, scoped, tag = 'internal scratch']
  %s0 = inlined_call_operand.vmem [shape: f32[2,8,32], index: 0, kind: input, shape index: {}]
  %s1 = inlined_call_operand.vmem [shape: f32[2,8,8], index: 1, kind: input, shape index: {}]
  %s2 = inlined_call_operand.vmem [shape: f32[1,32], index: 2, kind: input, shape index: {}]
  %s3 = inlined_call_operand.vmem [shape: f32[1,32], index: 3, kind: input, shape index: {}]
  %s4 = inlined_call_operand.vmem [shape: bf16[32,96], index: 4, kind: input, shape index: {}]
  %s5 = inlined_call_operand.vmem [shape: f32[1,96], index: 5, kind: input, shape index: {}]
  %s6 = inlined_call_operand.vmem [shape: bf16[32,32], index: 6, kind: input, shape index: {}]
  %s7 = inlined_call_operand.vmem [shape: f32[1,32], index: 7, kind: input, shape index: {}]
  %s8 = inlined_call_operand.vmem [shape: f32[1,32], index: 8, kind: input, shape index: {}]
  %s9 = inlined_call_operand.vmem [shape: f32[1,32], index: 9, kind: input, shape index: {}]
  %s10 = inlined_call_operand.vmem [shape: bf16[32,128], index: 10, kind: input, shape index: {}]
  %s11 = inlined_call_operand.vmem [shape: f32[1,128], index: 11, kind: input, shape index: {}]
  %s12 = inlined_call_operand.vmem [shape: bf16[128,32], index: 12, kind: input, shape index: {}]
  %s13 = inlined_call_operand.vmem [shape: f32[1,32], index: 13, kind: input, shape index: {}]
  %s14 = inlined_call_operand.hbm [shape: f32[2,8,32], index: 14, kind: output, shape index: {}]
  %s15 = sld [smem:[#allocation0]]
  $region66: #{tpu_custom_call.1} parent=0
    _
  %s17 = ssub.s32 1, %s15
  %s18 = scalar_select 0, %s17, %s15
  $region1: #{tpu_custom_call.1} parent=0
    #allocation2 [shape = 'u8[8192]{0}', space=vmem, size = 0x2000, scoped, tag = 'output window, operand 0, single buffered']
    #allocation3 [shape = 's32[1]{0}', space=sflag, size = 0x4, scoped, tag = 'scoped memory for tpu_custom_call.1']
    %19 = vsyncpa [#allocation3], 0
    // Predicated region
    $region2: #{tpu_custom_call.1} parent=1 // pred_check
      _
    $region3: #{tpu_custom_call.1} parent=1 // pred_check_branch
      %21 = sbr.rel (0) target = $region5
    $region4: #{tpu_custom_call.1} parent=1 // pred_region
      _
    $region5: #{tpu_custom_call.1} parent=1 // pred_fallthru
      _
    // Predicated region
    $region6: #{tpu_custom_call.1} parent=1 // pred_check
      _
    $region7: #{tpu_custom_call.1} parent=1 // pred_check_branch
      %23 = sbr.rel (0) target = $region9
    $region8: #{tpu_custom_call.1} parent=1 // pred_region
      _
    $region9: #{tpu_custom_call.1} parent=1 // pred_fallthru
      _
    // Predicated region
    $region10: #{tpu_custom_call.1} parent=1 // pred_check
      _
    $region11: #{tpu_custom_call.1} parent=1 // pred_check_branch
      %25 = sbr.rel (0) target = $region13
    $region12: #{tpu_custom_call.1} parent=1 // pred_region
      _
    $region13: #{tpu_custom_call.1} parent=1 // pred_fallthru
      _
    // Predicated region
    $region14: #{tpu_custom_call.1} parent=1 // pred_check
      _
    $region15: #{tpu_custom_call.1} parent=1 // pred_check_branch
      %27 = sbr.rel (0) target = $region17
    $region16: #{tpu_custom_call.1} parent=1 // pred_region
      _
    $region17: #{tpu_custom_call.1} parent=1 // pred_fallthru
      _
    // Predicated region
    $region18: #{tpu_custom_call.1} parent=1 // pred_check
      _
    $region19: #{tpu_custom_call.1} parent=1 // pred_check_branch
      %29 = sbr.rel (0) target = $region21
    $region20: #{tpu_custom_call.1} parent=1 // pred_region
      _
    $region21: #{tpu_custom_call.1} parent=1 // pred_fallthru
      _
    // Predicated region
    $region22: #{tpu_custom_call.1} parent=1 // pred_check
      _
    $region23: #{tpu_custom_call.1} parent=1 // pred_check_branch
      %31 = sbr.rel (0) target = $region25
    $region24: #{tpu_custom_call.1} parent=1 // pred_region
      _
    $region25: #{tpu_custom_call.1} parent=1 // pred_fallthru
      _
    // Predicated region
    $region26: #{tpu_custom_call.1} parent=1 // pred_check
      _
    $region27: #{tpu_custom_call.1} parent=1 // pred_check_branch
      %33 = sbr.rel (0) target = $region29
    $region28: #{tpu_custom_call.1} parent=1 // pred_region
      _
    $region29: #{tpu_custom_call.1} parent=1 // pred_fallthru
      _
    // Predicated region
    $region30: #{tpu_custom_call.1} parent=1 // pred_check
      _
    $region31: #{tpu_custom_call.1} parent=1 // pred_check_branch
      %35 = sbr.rel (0) target = $region33
    $region32: #{tpu_custom_call.1} parent=1 // pred_region
      _
    $region33: #{tpu_custom_call.1} parent=1 // pred_fallthru
      _
    // Predicated region
    $region34: #{tpu_custom_call.1} parent=1 // pred_check
      _
    $region35: #{tpu_custom_call.1} parent=1 // pred_check_branch
      %37 = sbr.rel (0) target = $region37
    $region36: #{tpu_custom_call.1} parent=1 // pred_region
      _
    $region37: #{tpu_custom_call.1} parent=1 // pred_fallthru
      _
    // Predicated region
    $region38: #{tpu_custom_call.1} parent=1 // pred_check
      _
    $region39: #{tpu_custom_call.1} parent=1 // pred_check_branch
      %39 = sbr.rel (0) target = $region41
    $region40: #{tpu_custom_call.1} parent=1 // pred_region
      _
    $region41: #{tpu_custom_call.1} parent=1 // pred_fallthru
      _
    // Predicated region
    $region42: #{tpu_custom_call.1} parent=1 // pred_check
      _
    $region43: #{tpu_custom_call.1} parent=1 // pred_check_branch
      %41 = sbr.rel (0) target = $region45
    $region44: #{tpu_custom_call.1} parent=1 // pred_region
      _
    $region45: #{tpu_custom_call.1} parent=1 // pred_fallthru
      _
    // Predicated region
    $region46: #{tpu_custom_call.1} parent=1 // pred_check
      _
    $region47: #{tpu_custom_call.1} parent=1 // pred_check_branch
      %43 = sbr.rel (0) target = $region49
    $region48: #{tpu_custom_call.1} parent=1 // pred_region
      _
    $region49: #{tpu_custom_call.1} parent=1 // pred_fallthru
      _
    // Predicated region
    $region50: #{tpu_custom_call.1} parent=1 // pred_check
      _
    $region51: #{tpu_custom_call.1} parent=1 // pred_check_branch
      %45 = sbr.rel (0) target = $region53
    $region52: #{tpu_custom_call.1} parent=1 // pred_region
      _
    $region53: #{tpu_custom_call.1} parent=1 // pred_fallthru
      _
    // Predicated region
    $region54: #{tpu_custom_call.1} parent=1 // pred_check
      _
    $region55: #{tpu_custom_call.1} parent=1 // pred_check_branch
      %47 = sbr.rel (0) target = $region57
    $region56: #{tpu_custom_call.1} parent=1 // pred_region
      _
    $region57: #{tpu_custom_call.1} parent=1 // pred_fallthru
      _
    %v49 = vld [vmem:[%s0] sm:$0xff]
    %v50 = vld [vmem:[%s0 + $0x8] sm:$0xff]
    %v51 = vld [vmem:[%s1] sm:$0xff]
    %v52 = vld [vmem:[%s1 + $0x8] sm:$0xff]
    %v53 = vld [vmem:[%s2] sm:$0x1]
    %v54 = vld [vmem:[%s3] sm:$0x1]
    %vm55 = vcmask 261120
    %v56 = vsel %vm55, %v49, 0.0
    %57 = vadd.xlane.f32.xlu0 %v56
    %v58 = vpop.xlane.xlu0 %57
    %v59 = vsel %vm55, %v50, 0.0
    %60 = vadd.xlane.f32.xlu0 %v59
    %v61 = vpop.xlane.xlu0 %60
    %v62 = vrcp.pop 32.0
    %v63 = vmul.f32 %v58, %v62
    %v64 = vmul.f32 %v61, %v62
    %v65 = vsub.f32 %v49, %v63
    %v66 = vsub.f32 %v50, %v64
    %v67 = vmul.f32 %v65, %v65
    %v68 = vmul.f32 %v66, %v66
    %v69 = vsel %vm55, %v67, 0.0
    %70 = vadd.xlane.f32.xlu0 %v69
    %v71 = vpop.xlane.xlu0 %70
    %v72 = vsel %vm55, %v68, 0.0
    %73 = vadd.xlane.f32.xlu0 %v72
    %v74 = vpop.xlane.xlu0 %73
    %v75 = vmul.f32 %v71, %v62
    %v76 = vmul.f32 %v74, %v62
    %v77 = vadd.f32 %v75, 1e-05
    %v78 = vadd.f32 %v76, 1e-05
    %v79 = vrsqrt.pop %v77
    %v80 = vrsqrt.pop %v78
    %v81 = vmul.f32 %v65, %v79
    %v82 = vmul.f32 %v66, %v80
    %v84 = vlaneseq
    %v85 = vshrl.u32 %v84, 7
    %v86 = vsub.s32 0, %v85
    %v87 = vrot.slane %v53, %v86
    %v89 = vmul.f32 %v81, %v87
    %v90 = vmul.f32 %v82, %v87
    %v92 = vlaneseq
    %v93 = vshrl.u32 %v92, 7
    %v94 = vsub.s32 0, %v93
    %v95 = vrot.slane %v54, %v94
    %v97 = vadd.f32 %v89, %v95
    %v98 = vadd.f32 %v90, %v95
    %v99 = vpack.c.bf16 %v98, %v97
    %v100 = vld [vmem:[%s4] sm:$0xf]
    %v101 = vld [vmem:[%s4 + $0x4] sm:$0xf]
    %v102 = vld [vmem:[%s4 + $0x8] sm:$0xf]
    %v103 = vld [vmem:[%s4 + $0xc] sm:$0xf]
    %v104 = vld [vmem:[%s5] sm:$0x1]
    %v106 = vlaneseq
    %v107 = vshrl.u32 %v106, 7
    %v108 = vsub.s32 0, %v107
    %v109 = vrot.slane %v104, %v108
    %v115 = vunpack.c.l.b16 %v100
    %v116 = vunpack.c.l.b16 %v101
    %v117 = vunpack.c.l.b16 %v102
    %v118 = vunpack.c.l.b16 %v103
    %v119 = vpack.c.b16 %v116, %v115
    %v120 = vpack.c.b16 %v118, %v117
    %v124 = vsel %vm55, %v99, 0
    %126 = vmatprep.subr.bf16.mxu0 0
    %127 = vmatpush1.bf16.msra.mxu0 %v119
    %128 = vmatprep.subr.bf16.mxu0 0
    %129 = vmatpush1.bf16.msra.mxu0 %v120
    %130 = vmatprep.subr.bf16.mxu0 0
    %131 = vmatpush1.bf16.msra.mxu0 0
    %132 = vmatprep.subr.bf16.mxu0 0
    %133 = vmatpush1.bf16.msra.mxu0 0
    %134 = vmatprep.subr.bf16.mxu0 0
    %135 = vmatpush1.bf16.msra.mxu0 0
    %136 = vmatprep.subr.bf16.mxu0 0
    %137 = vmatpush1.bf16.msra.mxu0 0
    %138 = vmatprep.subr.bf16.mxu0 0
    %139 = vmatpush1.bf16.msra.mxu0 0
    %140 = vmatprep.subr.bf16.mxu0 0
    %141 = vmatpush1.bf16.msra.mxu0 0
    %142 = vmatprep.subr.bf16.mxu0 0
    %143 = vmatpush1.bf16.msra.mxu0 0
    %144 = vmatprep.subr.bf16.mxu0 0
    %145 = vmatpush1.bf16.msra.mxu0 0
    %146 = vmatprep.subr.bf16.mxu0 0
    %147 = vmatpush1.bf16.msra.mxu0 0
    %148 = vmatprep.subr.bf16.mxu0 0
    %149 = vmatpush1.bf16.msra.mxu0 0
    %150 = vmatprep.subr.bf16.mxu0 0
    %151 = vmatpush1.bf16.msra.mxu0 0
    %152 = vmatprep.subr.bf16.mxu0 0
    %153 = vmatpush1.bf16.msra.mxu0 0
    %154 = vmatprep.subr.bf16.mxu0 0
    %155 = vmatpush1.bf16.msra.mxu0 0
    %156 = vmatprep.subr.bf16.mxu0 0
    %157 = vmatpush1.bf16.msra.mxu0 0
    %158 = vmatprep.mubr.bf16.mxu0 0
    %159 = vmatmul.mubr.bf16.gmra.mrb[0].mxu0 %v124
    %v160 = vpop.f32.mrb[0].mxu0
    %v161 = vadd.f32 %v109, %v160
    %v162 = vpop.f32.mrb[0].mxu0
    %v163 = vpop.f32.mrb[0].mxu0
    %v164 = vadd.f32 %v109, %v163
    %v165 = vpop.f32.mrb[0].mxu0
    %166 = vdwg.mxu0
    %v167 = vmul.f32 %v161, 0.35355338
    %v168 = vmul.f32 %v164, 0.35355338
    %v169 = vpack.c.bf16 %v168, %v167
    %v170 = vpack.c.bf16 %v164, %v161
    %v172 = vunpack.c.l.b16 %v169
    %v173 = vunpack.c.h.b16 %v169
    %v174 = vpack.c.b16 %v172, %v172
    %v175 = vpack.c.b16 %v173, %v173
    %v177 = vunpack.c.l.b16 %v170
    %v178 = vunpack.c.h.b16 %v170
    %v179 = vpack.c.b16 %v177, %v177
    %180 = vrot.lane.b32.xlu0 %v179, 96
    %v181 = vpop.permute.xlu0 %180
    %vm182 = vcmask 64512
    %v184 = vsel %vm182, %v174, 0
    %v187 = vsel %vm182, %v181, 0
    %189 = vmatprep.subr.bf16.mxu0 0
    %190 = vmatpush1.bf16.xpose.msra.mxu0 %v187
    %191 = vmatprep.subr.bf16.mxu0 0
    %192 = vmatpush1.bf16.xpose.msra.mxu0 0
    %193 = vmatprep.subr.bf16.mxu0 0
    %194 = vmatpush1.bf16.xpose.msra.mxu0 0
    %195 = vmatprep.subr.bf16.mxu0 0
    %196 = vmatpush1.bf16.xpose.msra.mxu0 0
    %197 = vmatprep.subr.bf16.mxu0 0
    %198 = vmatpush1.bf16.xpose.msra.mxu0 0
    %199 = vmatprep.subr.bf16.mxu0 0
    %200 = vmatpush1.bf16.xpose.msra.mxu0 0
    %201 = vmatprep.subr.bf16.mxu0 0
    %202 = vmatpush1.bf16.xpose.msra.mxu0 0
    %203 = vmatprep.subr.bf16.mxu0 0
    %204 = vmatpush1.bf16.xpose.msra.mxu0 0
    %205 = vmatprep.subr.bf16.mxu0 0
    %206 = vmatpush1.bf16.xpose.msra.mxu0 0
    %207 = vmatprep.subr.bf16.mxu0 0
    %208 = vmatpush1.bf16.xpose.msra.mxu0 0
    %209 = vmatprep.subr.bf16.mxu0 0
    %210 = vmatpush1.bf16.xpose.msra.mxu0 0
    %211 = vmatprep.subr.bf16.mxu0 0
    %212 = vmatpush1.bf16.xpose.msra.mxu0 0
    %213 = vmatprep.subr.bf16.mxu0 0
    %214 = vmatpush1.bf16.xpose.msra.mxu0 0
    %215 = vmatprep.subr.bf16.mxu0 0
    %216 = vmatpush1.bf16.xpose.msra.mxu0 0
    %217 = vmatprep.subr.bf16.mxu0 0
    %218 = vmatpush1.bf16.xpose.msra.mxu0 0
    %219 = vmatprep.subr.bf16.mxu0 0
    %220 = vmatpush1.bf16.xpose.msra.mxu0 0
    %221 = vmatprep.mubr.bf16.mxu0 0
    %222 = vmatmul.mubr.bf16.gmra.mrb[0].mxu0 %v184
    %v223 = vpop.f32.mrb[0].mxu0
    %v224 = vadd.f32 %v51, %v223
    %v225 = vpop.f32.mrb[0].mxu0
    %v226 = vpop.f32.mrb[0].mxu0
    %v227 = vpop.f32.mrb[0].mxu0
    %228 = vdwg.mxu0
    %v229 = vpack.c.b16 %v178, %v178
    %230 = vrot.lane.b32.xlu0 %v229, 96
    %v231 = vpop.permute.xlu0 %230
    %v233 = vsel %vm182, %v175, 0
    %v236 = vsel %vm182, %v231, 0
    %238 = vmatprep.subr.bf16.mxu0 0
    %239 = vmatpush1.bf16.xpose.msra.mxu0 %v236
    %240 = vmatprep.subr.bf16.mxu0 0
    %241 = vmatpush1.bf16.xpose.msra.mxu0 0
    %242 = vmatprep.subr.bf16.mxu0 0
    %243 = vmatpush1.bf16.xpose.msra.mxu0 0
    %244 = vmatprep.subr.bf16.mxu0 0
    %245 = vmatpush1.bf16.xpose.msra.mxu0 0
    %246 = vmatprep.subr.bf16.mxu0 0
    %247 = vmatpush1.bf16.xpose.msra.mxu0 0
    %248 = vmatprep.subr.bf16.mxu0 0
    %249 = vmatpush1.bf16.xpose.msra.mxu0 0
    %250 = vmatprep.subr.bf16.mxu0 0
    %251 = vmatpush1.bf16.xpose.msra.mxu0 0
    %252 = vmatprep.subr.bf16.mxu0 0
    %253 = vmatpush1.bf16.xpose.msra.mxu0 0
    %254 = vmatprep.subr.bf16.mxu0 0
    %255 = vmatpush1.bf16.xpose.msra.mxu0 0
    %256 = vmatprep.subr.bf16.mxu0 0
    %257 = vmatpush1.bf16.xpose.msra.mxu0 0
    %258 = vmatprep.subr.bf16.mxu0 0
    %259 = vmatpush1.bf16.xpose.msra.mxu0 0
    %260 = vmatprep.subr.bf16.mxu0 0
    %261 = vmatpush1.bf16.xpose.msra.mxu0 0
    %262 = vmatprep.subr.bf16.mxu0 0
    %263 = vmatpush1.bf16.xpose.msra.mxu0 0
    %264 = vmatprep.subr.bf16.mxu0 0
    %265 = vmatpush1.bf16.xpose.msra.mxu0 0
    %266 = vmatprep.subr.bf16.mxu0 0
    %267 = vmatpush1.bf16.xpose.msra.mxu0 0
    %268 = vmatprep.subr.bf16.mxu0 0
    %269 = vmatpush1.bf16.xpose.msra.mxu0 0
    %270 = vmatprep.mubr.bf16.mxu0 0
    %271 = vmatmul.mubr.bf16.gmra.mrb[0].mxu0 %v233
    %v272 = vpop.f32.mrb[0].mxu0
    %v273 = vadd.f32 %v52, %v272
    %v274 = vpop.f32.mrb[0].mxu0
    %v275 = vpop.f32.mrb[0].mxu0
    %v276 = vpop.f32.mrb[0].mxu0
    %277 = vdwg.mxu0
    %v278 = vsel %vm182, %v224, -inf
    %279 = vmax.xlane.f32.xlu0 %v278
    %v280 = vpop.xlane.xlu0 %279
    %v281 = vsel %vm182, %v273, -inf
    %282 = vmax.xlane.f32.xlu0 %v281
    %v283 = vpop.xlane.xlu0 %282
    %v284 = vsub.f32 %v224, %v280
    %v285 = vsub.f32 %v273, %v283
    %v286 = vmul.f32 %v284, 1.442695
    %v287 = vpow.pop %v286
    %v288 = vmul.f32 %v285, 1.442695
    %v289 = vpow.pop %v288
    %v290 = vsel %vm182, %v287, 0.0
    %291 = vadd.xlane.f32.xlu0 %v290
    %v292 = vpop.xlane.xlu0 %291
    %v293 = vsel %vm182, %v289, 0.0
    %294 = vadd.xlane.f32.xlu0 %v293
    %v295 = vpop.xlane.xlu0 %294
    %v296 = vrcp.pop %v292
    %v297 = vrcp.pop %v295
    %v298 = vmul.f32 %v287, %v296
    %v299 = vmul.f32 %v289, %v297
    %v300 = vpack.c.bf16 %v298, %v298
    %v301 = vpack.c.bf16 %v299, %v299
    %302 = vrot.lane.b32.xlu0 %v179, 64
    %v303 = vpop.permute.xlu0 %302
    %v305 = vsel %vm182, %v300, 0
    %vm307 = vcmask 1043456
    %v309 = vsel %vm307, %v303, 0
    %311 = vmatprep.subr.bf16.mxu0 0
    %312 = vmatpush1.bf16.msra.mxu0 %v309
    %313 = vmatprep.subr.bf16.mxu0 0
    %314 = vmatpush1.bf16.msra.mxu0 0
    %315 = vmatprep.subr.bf16.mxu0 0
    %316 = vmatpush1.bf16.msra.mxu0 0
    %317 = vmatprep.subr.bf16.mxu0 0
    %318 = vmatpush1.bf16.msra.mxu0 0
    %319 = vmatprep.subr.bf16.mxu0 0
    %320 = vmatpush1.bf16.msra.mxu0 0
    %321 = vmatprep.subr.bf16.mxu0 0
    %322 = vmatpush1.bf16.msra.mxu0 0
    %323 = vmatprep.subr.bf16.mxu0 0
    %324 = vmatpush1.bf16.msra.mxu0 0
    %325 = vmatprep.subr.bf16.mxu0 0
    %326 = vmatpush1.bf16.msra.mxu0 0
    %327 = vmatprep.subr.bf16.mxu0 0
    %328 = vmatpush1.bf16.msra.mxu0 0
    %329 = vmatprep.subr.bf16.mxu0 0
    %330 = vmatpush1.bf16.msra.mxu0 0
    %331 = vmatprep.subr.bf16.mxu0 0
    %332 = vmatpush1.bf16.msra.mxu0 0
    %333 = vmatprep.subr.bf16.mxu0 0
    %334 = vmatpush1.bf16.msra.mxu0 0
    %335 = vmatprep.subr.bf16.mxu0 0
    %336 = vmatpush1.bf16.msra.mxu0 0
    %337 = vmatprep.subr.bf16.mxu0 0
    %338 = vmatpush1.bf16.msra.mxu0 0
    %339 = vmatprep.subr.bf16.mxu0 0
    %340 = vmatpush1.bf16.msra.mxu0 0
    %341 = vmatprep.subr.bf16.mxu0 0
    %342 = vmatpush1.bf16.msra.mxu0 0
    %343 = vmatprep.mubr.bf16.mxu0 0
    %344 = vmatmul.mubr.bf16.gmra.mrb[0].mxu0 %v305
    %v345 = vpop.f32.mrb[0].mxu0
    %v346 = vadd.f32 0.0, %v345
    %v347 = vpop.f32.mrb[0].mxu0
    %v348 = vpop.f32.mrb[0].mxu0
    %v349 = vpop.f32.mrb[0].mxu0
    %350 = vdwg.mxu0
    %351 = vrot.lane.b32.xlu0 %v229, 64
    %v352 = vpop.permute.xlu0 %351
    %v354 = vsel %vm182, %v301, 0
    %v357 = vsel %vm307, %v352, 0
    %359 = vmatprep.subr.bf16.mxu0 0
    %360 = vmatpush1.bf16.msra.mxu0 %v357
    %361 = vmatprep.subr.bf16.mxu0 0
    %362 = vmatpush1.bf16.msra.mxu0 0
    %363 = vmatprep.subr.bf16.mxu0 0
    %364 = vmatpush1.bf16.msra.mxu0 0
    %365 = vmatprep.subr.bf16.mxu0 0
    %366 = vmatpush1.bf16.msra.mxu0 0
    %367 = vmatprep.subr.bf16.mxu0 0
    %368 = vmatpush1.bf16.msra.mxu0 0
    %369 = vmatprep.subr.bf16.mxu0 0
    %370 = vmatpush1.bf16.msra.mxu0 0
    %371 = vmatprep.subr.bf16.mxu0 0
    %372 = vmatpush1.bf16.msra.mxu0 0
    %373 = vmatprep.subr.bf16.mxu0 0
    %374 = vmatpush1.bf16.msra.mxu0 0
    %375 = vmatprep.subr.bf16.mxu0 0
    %376 = vmatpush1.bf16.msra.mxu0 0
    %377 = vmatprep.subr.bf16.mxu0 0
    %378 = vmatpush1.bf16.msra.mxu0 0
    %379 = vmatprep.subr.bf16.mxu0 0
    %380 = vmatpush1.bf16.msra.mxu0 0
    %381 = vmatprep.subr.bf16.mxu0 0
    %382 = vmatpush1.bf16.msra.mxu0 0
    %383 = vmatprep.subr.bf16.mxu0 0
    %384 = vmatpush1.bf16.msra.mxu0 0
    %385 = vmatprep.subr.bf16.mxu0 0
    %386 = vmatpush1.bf16.msra.mxu0 0
    %387 = vmatprep.subr.bf16.mxu0 0
    %388 = vmatpush1.bf16.msra.mxu0 0
    %389 = vmatprep.subr.bf16.mxu0 0
    %390 = vmatpush1.bf16.msra.mxu0 0
    %391 = vmatprep.mubr.bf16.mxu0 0
    %392 = vmatmul.mubr.bf16.gmra.mrb[0].mxu0 %v354
    %v393 = vpop.f32.mrb[0].mxu0
    %v394 = vadd.f32 0.0, %v393
    %v395 = vpop.f32.mrb[0].mxu0
    %v396 = vpop.f32.mrb[0].mxu0
    %v397 = vpop.f32.mrb[0].mxu0
    %398 = vdwg.mxu0
    %v399 = vpack.c.bf16 %v394, %v346
    %v400 = vld [vmem:[%s6] sm:$0xf]
    %401 = vrot.lane.b32.xlu0 %v174, 120
    %v402 = vpop.permute.xlu0 %401
    %403 = vrot.lane.b32.xlu0 %v179, 88
    %v404 = vpop.permute.xlu0 %403
    %v406 = vsel %vm182, %v402, 0
    %v409 = vsel %vm182, %v404, 0
    %411 = vmatprep.subr.bf16.mxu0 0
    %412 = vmatpush1.bf16.xpose.msra.mxu0 %v409
    %413 = vmatprep.subr.bf16.mxu0 0
    %414 = vmatpush1.bf16.xpose.msra.mxu0 0
    %415 = vmatprep.subr.bf16.mxu0 0
    %416 = vmatpush1.bf16.xpose.msra.mxu0 0
    %417 = vmatprep.subr.bf16.mxu0 0
    %418 = vmatpush1.bf16.xpose.msra.mxu0 0
    %419 = vmatprep.subr.bf16.mxu0 0
    %420 = vmatpush1.bf16.xpose.msra.mxu0 0
    %421 = vmatprep.subr.bf16.mxu0 0
    %422 = vmatpush1.bf16.xpose.msra.mxu0 0
    %423 = vmatprep.subr.bf16.mxu0 0
    %424 = vmatpush1.bf16.xpose.msra.mxu0 0
    %425 = vmatprep.subr.bf16.mxu0 0
    %426 = vmatpush1.bf16.xpose.msra.mxu0 0
    %427 = vmatprep.subr.bf16.mxu0 0
    %428 = vmatpush1.bf16.xpose.msra.mxu0 0
    %429 = vmatprep.subr.bf16.mxu0 0
    %430 = vmatpush1.bf16.xpose.msra.mxu0 0
    %431 = vmatprep.subr.bf16.mxu0 0
    %432 = vmatpush1.bf16.xpose.msra.mxu0 0
    %433 = vmatprep.subr.bf16.mxu0 0
    %434 = vmatpush1.bf16.xpose.msra.mxu0 0
    %435 = vmatprep.subr.bf16.mxu0 0
    %436 = vmatpush1.bf16.xpose.msra.mxu0 0
    %437 = vmatprep.subr.bf16.mxu0 0
    %438 = vmatpush1.bf16.xpose.msra.mxu0 0
    %439 = vmatprep.subr.bf16.mxu0 0
    %440 = vmatpush1.bf16.xpose.msra.mxu0 0
    %441 = vmatprep.subr.bf16.mxu0 0
    %442 = vmatpush1.bf16.xpose.msra.mxu0 0
    %443 = vmatprep.mubr.bf16.mxu0 0
    %444 = vmatmul.mubr.bf16.gmra.mrb[0].mxu0 %v406
    %v445 = vpop.f32.mrb[0].mxu0
    %v446 = vadd.f32 %v51, %v445
    %v447 = vpop.f32.mrb[0].mxu0
    %v448 = vpop.f32.mrb[0].mxu0
    %v449 = vpop.f32.mrb[0].mxu0
    %450 = vdwg.mxu0
    %451 = vrot.lane.b32.xlu0 %v175, 120
    %v452 = vpop.permute.xlu0 %451
    %453 = vrot.lane.b32.xlu0 %v229, 88
    %v454 = vpop.permute.xlu0 %453
    %v456 = vsel %vm182, %v452, 0
    %v459 = vsel %vm182, %v454, 0
    %461 = vmatprep.subr.bf16.mxu0 0
    %462 = vmatpush1.bf16.xpose.msra.mxu0 %v459
    %463 = vmatprep.subr.bf16.mxu0 0
    %464 = vmatpush1.bf16.xpose.msra.mxu0 0
    %465 = vmatprep.subr.bf16.mxu0 0
    %466 = vmatpush1.bf16.xpose.msra.mxu0 0
    %467 = vmatprep.subr.bf16.mxu0 0
    %468 = vmatpush1.bf16.xpose.msra.mxu0 0
    %469 = vmatprep.subr.bf16.mxu0 0
    %470 = vmatpush1.bf16.xpose.msra.mxu0 0
    %471 = vmatprep.subr.bf16.mxu0 0
    %472 = vmatpush1.bf16.xpose.msra.mxu0 0
    %473 = vmatprep.subr.bf16.mxu0 0
    %474 = vmatpush1.bf16.xpose.msra.mxu0 0
    %475 = vmatprep.subr.bf16.mxu0 0
    %476 = vmatpush1.bf16.xpose.msra.mxu0 0
    %477 = vmatprep.subr.bf16.mxu0 0
    %478 = vmatpush1.bf16.xpose.msra.mxu0 0
    %479 = vmatprep.subr.bf16.mxu0 0
    %480 = vmatpush1.bf16.xpose.msra.mxu0 0
    %481 = vmatprep.subr.bf16.mxu0 0
    %482 = vmatpush1.bf16.xpose.msra.mxu0 0
    %483 = vmatprep.subr.bf16.mxu0 0
    %484 = vmatpush1.bf16.xpose.msra.mxu0 0
    %485 = vmatprep.subr.bf16.mxu0 0
    %486 = vmatpush1.bf16.xpose.msra.mxu0 0
    %487 = vmatprep.subr.bf16.mxu0 0
    %488 = vmatpush1.bf16.xpose.msra.mxu0 0
    %489 = vmatprep.subr.bf16.mxu0 0
    %490 = vmatpush1.bf16.xpose.msra.mxu0 0
    %491 = vmatprep.subr.bf16.mxu0 0
    %492 = vmatpush1.bf16.xpose.msra.mxu0 0
    %493 = vmatprep.mubr.bf16.mxu0 0
    %494 = vmatmul.mubr.bf16.gmra.mrb[0].mxu0 %v456
    %v495 = vpop.f32.mrb[0].mxu0
    %v496 = vadd.f32 %v52, %v495
    %v497 = vpop.f32.mrb[0].mxu0
    %v498 = vpop.f32.mrb[0].mxu0
    %v499 = vpop.f32.mrb[0].mxu0
    %500 = vdwg.mxu0
    %v501 = vsel %vm182, %v446, -inf
    %502 = vmax.xlane.f32.xlu0 %v501
    %v503 = vpop.xlane.xlu0 %502
    %v504 = vsel %vm182, %v496, -inf
    %505 = vmax.xlane.f32.xlu0 %v504
    %v506 = vpop.xlane.xlu0 %505
    %v507 = vsub.f32 %v446, %v503
    %v508 = vsub.f32 %v496, %v506
    %v509 = vmul.f32 %v507, 1.442695
    %v510 = vpow.pop %v509
    %v511 = vmul.f32 %v508, 1.442695
    %v512 = vpow.pop %v511
    %v513 = vsel %vm182, %v510, 0.0
    %514 = vadd.xlane.f32.xlu0 %v513
    %v515 = vpop.xlane.xlu0 %514
    %v516 = vsel %vm182, %v512, 0.0
    %517 = vadd.xlane.f32.xlu0 %v516
    %v518 = vpop.xlane.xlu0 %517
    %v519 = vrcp.pop %v515
    %v520 = vrcp.pop %v518
    %v521 = vmul.f32 %v510, %v519
    %v522 = vmul.f32 %v512, %v520
    %v523 = vpack.c.bf16 %v521, %v521
    %v524 = vpack.c.bf16 %v522, %v522
    %525 = vrot.lane.b32.xlu0 %v179, 56
    %v526 = vpop.permute.xlu0 %525
    %v528 = vsel %vm182, %v523, 0
    %v531 = vsel %vm307, %v526, 0
    %533 = vmatprep.subr.bf16.mxu0 0
    %534 = vmatpush1.bf16.msra.mxu0 %v531
    %535 = vmatprep.subr.bf16.mxu0 0
    %536 = vmatpush1.bf16.msra.mxu0 0
    %537 = vmatprep.subr.bf16.mxu0 0
    %538 = vmatpush1.bf16.msra.mxu0 0
    %539 = vmatprep.subr.bf16.mxu0 0
    %540 = vmatpush1.bf16.msra.mxu0 0
    %541 = vmatprep.subr.bf16.mxu0 0
    %542 = vmatpush1.bf16.msra.mxu0 0
    %543 = vmatprep.subr.bf16.mxu0 0
    %544 = vmatpush1.bf16.msra.mxu0 0
    %545 = vmatprep.subr.bf16.mxu0 0
    %546 = vmatpush1.bf16.msra.mxu0 0
    %547 = vmatprep.subr.bf16.mxu0 0
    %548 = vmatpush1.bf16.msra.mxu0 0
    %549 = vmatprep.subr.bf16.mxu0 0
    %550 = vmatpush1.bf16.msra.mxu0 0
    %551 = vmatprep.subr.bf16.mxu0 0
    %552 = vmatpush1.bf16.msra.mxu0 0
    %553 = vmatprep.subr.bf16.mxu0 0
    %554 = vmatpush1.bf16.msra.mxu0 0
    %555 = vmatprep.subr.bf16.mxu0 0
    %556 = vmatpush1.bf16.msra.mxu0 0
    %557 = vmatprep.subr.bf16.mxu0 0
    %558 = vmatpush1.bf16.msra.mxu0 0
    %559 = vmatprep.subr.bf16.mxu0 0
    %560 = vmatpush1.bf16.msra.mxu0 0
    %561 = vmatprep.subr.bf16.mxu0 0
    %562 = vmatpush1.bf16.msra.mxu0 0
    %563 = vmatprep.subr.bf16.mxu0 0
    %564 = vmatpush1.bf16.msra.mxu0 0
    %565 = vmatprep.mubr.bf16.mxu0 0
    %566 = vmatmul.mubr.bf16.gmra.mrb[0].mxu0 %v528
    %v567 = vpop.f32.mrb[0].mxu0
    %v568 = vadd.f32 0.0, %v567
    %v569 = vpop.f32.mrb[0].mxu0
    %v570 = vpop.f32.mrb[0].mxu0
    %v571 = vpop.f32.mrb[0].mxu0
    %572 = vdwg.mxu0
    %573 = vrot.lane.b32.xlu0 %v229, 56
    %v574 = vpop.permute.xlu0 %573
    %v576 = vsel %vm182, %v524, 0
    %v579 = vsel %vm307, %v574, 0
    %581 = vmatprep.subr.bf16.mxu0 0
    %582 = vmatpush1.bf16.msra.mxu0 %v579
    %583 = vmatprep.subr.bf16.mxu0 0
    %584 = vmatpush1.bf16.msra.mxu0 0
    %585 = vmatprep.subr.bf16.mxu0 0
    %586 = vmatpush1.bf16.msra.mxu0 0
    %587 = vmatprep.subr.bf16.mxu0 0
    %588 = vmatpush1.bf16.msra.mxu0 0
    %589 = vmatprep.subr.bf16.mxu0 0
    %590 = vmatpush1.bf16.msra.mxu0 0
    %591 = vmatprep.subr.bf16.mxu0 0
    %592 = vmatpush1.bf16.msra.mxu0 0
    %593 = vmatprep.subr.bf16.mxu0 0
    %594 = vmatpush1.bf16.msra.mxu0 0
    %595 = vmatprep.subr.bf16.mxu0 0
    %596 = vmatpush1.bf16.msra.mxu0 0
    %597 = vmatprep.subr.bf16.mxu0 0
    %598 = vmatpush1.bf16.msra.mxu0 0
    %599 = vmatprep.subr.bf16.mxu0 0
    %600 = vmatpush1.bf16.msra.mxu0 0
    %601 = vmatprep.subr.bf16.mxu0 0
    %602 = vmatpush1.bf16.msra.mxu0 0
    %603 = vmatprep.subr.bf16.mxu0 0
    %604 = vmatpush1.bf16.msra.mxu0 0
    %605 = vmatprep.subr.bf16.mxu0 0
    %606 = vmatpush1.bf16.msra.mxu0 0
    %607 = vmatprep.subr.bf16.mxu0 0
    %608 = vmatpush1.bf16.msra.mxu0 0
    %609 = vmatprep.subr.bf16.mxu0 0
    %610 = vmatpush1.bf16.msra.mxu0 0
    %611 = vmatprep.subr.bf16.mxu0 0
    %612 = vmatpush1.bf16.msra.mxu0 0
    %613 = vmatprep.mubr.bf16.mxu0 0
    %614 = vmatmul.mubr.bf16.gmra.mrb[0].mxu0 %v576
    %v615 = vpop.f32.mrb[0].mxu0
    %v616 = vadd.f32 0.0, %v615
    %v617 = vpop.f32.mrb[0].mxu0
    %v618 = vpop.f32.mrb[0].mxu0
    %v619 = vpop.f32.mrb[0].mxu0
    %620 = vdwg.mxu0
    %v621 = vpack.c.bf16 %v616, %v568
    %v622 = vld [vmem:[%s6 + $0x4] sm:$0xf]
    %v624 = vsel %vm182, %v621, 0
    %v627 = vsel %vm307, %v622, 0
    %629 = vmatprep.subr.bf16.mxu0 0
    %630 = vmatpush1.bf16.msra.mxu0 %v627
    %631 = vmatprep.subr.bf16.mxu0 0
    %632 = vmatpush1.bf16.msra.mxu0 0
    %633 = vmatprep.subr.bf16.mxu0 0
    %634 = vmatpush1.bf16.msra.mxu0 0
    %635 = vmatprep.subr.bf16.mxu0 0
    %636 = vmatpush1.bf16.msra.mxu0 0
    %637 = vmatprep.subr.bf16.mxu0 0
    %638 = vmatpush1.bf16.msra.mxu0 0
    %639 = vmatprep.subr.bf16.mxu0 0
    %640 = vmatpush1.bf16.msra.mxu0 0
    %641 = vmatprep.subr.bf16.mxu0 0
    %642 = vmatpush1.bf16.msra.mxu0 0
    %643 = vmatprep.subr.bf16.mxu0 0
    %644 = vmatpush1.bf16.msra.mxu0 0
    %645 = vmatprep.subr.bf16.mxu0 0
    %646 = vmatpush1.bf16.msra.mxu0 0
    %647 = vmatprep.subr.bf16.mxu0 0
    %648 = vmatpush1.bf16.msra.mxu0 0
    %649 = vmatprep.subr.bf16.mxu0 0
    %650 = vmatpush1.bf16.msra.mxu0 0
    %651 = vmatprep.subr.bf16.mxu0 0
    %652 = vmatpush1.bf16.msra.mxu0 0
    %653 = vmatprep.subr.bf16.mxu0 0
    %654 = vmatpush1.bf16.msra.mxu0 0
    %655 = vmatprep.subr.bf16.mxu0 0
    %656 = vmatpush1.bf16.msra.mxu0 0
    %657 = vmatprep.subr.bf16.mxu0 0
    %658 = vmatpush1.bf16.msra.mxu0 0
    %659 = vmatprep.subr.bf16.mxu0 0
    %660 = vmatpush1.bf16.msra.mxu0 0
    %661 = vmatprep.mubr.bf16.mxu0 0
    %662 = vmatmul.mubr.bf16.gmra.mrb[0].mxu0 %v624
    %v663 = vpop.f32.mrb[0].mxu0
    %v664 = vadd.f32 0.0, %v663
    %v665 = vpop.f32.mrb[0].mxu0
    %v666 = vpop.f32.mrb[0].mxu0
    %v667 = vadd.f32 0.0, %v666
    %v668 = vpop.f32.mrb[0].mxu0
    %669 = vdwg.mxu0
    %v671 = vsel %vm182, %v399, 0
    %v674 = vsel %vm307, %v400, 0
    %676 = vmatprep.subr.bf16.mxu0 0
    %677 = vmatpush1.bf16.msra.mxu0 %v674
    %678 = vmatprep.subr.bf16.mxu0 0
    %679 = vmatpush1.bf16.msra.mxu0 0
    %680 = vmatprep.subr.bf16.mxu0 0
    %681 = vmatpush1.bf16.msra.mxu0 0
    %682 = vmatprep.subr.bf16.mxu0 0
    %683 = vmatpush1.bf16.msra.mxu0 0
    %684 = vmatprep.subr.bf16.mxu0 0
    %685 = vmatpush1.bf16.msra.mxu0 0
    %686 = vmatprep.subr.bf16.mxu0 0
    %687 = vmatpush1.bf16.msra.mxu0 0
    %688 = vmatprep.subr.bf16.mxu0 0
    %689 = vmatpush1.bf16.msra.mxu0 0
    %690 = vmatprep.subr.bf16.mxu0 0
    %691 = vmatpush1.bf16.msra.mxu0 0
    %692 = vmatprep.subr.bf16.mxu0 0
    %693 = vmatpush1.bf16.msra.mxu0 0
    %694 = vmatprep.subr.bf16.mxu0 0
    %695 = vmatpush1.bf16.msra.mxu0 0
    %696 = vmatprep.subr.bf16.mxu0 0
    %697 = vmatpush1.bf16.msra.mxu0 0
    %698 = vmatprep.subr.bf16.mxu0 0
    %699 = vmatpush1.bf16.msra.mxu0 0
    %700 = vmatprep.subr.bf16.mxu0 0
    %701 = vmatpush1.bf16.msra.mxu0 0
    %702 = vmatprep.subr.bf16.mxu0 0
    %703 = vmatpush1.bf16.msra.mxu0 0
    %704 = vmatprep.subr.bf16.mxu0 0
    %705 = vmatpush1.bf16.msra.mxu0 0
    %706 = vmatprep.subr.bf16.mxu0 0
    %707 = vmatpush1.bf16.msra.mxu0 0
    %708 = vmatprep.mubr.bf16.mxu0 0
    %709 = vmatmul.mubr.bf16.gmra.mrb[0].mxu0 %v671
    %v710 = vpop.f32.mrb[0].mxu0
    %v711 = vadd.f32 %v664, %v710
    %v712 = vpop.f32.mrb[0].mxu0
    %v713 = vpop.f32.mrb[0].mxu0
    %v714 = vadd.f32 %v667, %v713
    %v715 = vpop.f32.mrb[0].mxu0
    %716 = vdwg.mxu0
    %717 = vrot.lane.b32.xlu0 %v174, 112
    %v718 = vpop.permute.xlu0 %717
    %719 = vrot.lane.b32.xlu0 %v179, 80
    %v720 = vpop.permute.xlu0 %719
    %v722 = vsel %vm182, %v718, 0
    %v725 = vsel %vm182, %v720, 0
    %727 = vmatprep.subr.bf16.mxu0 0
    %728 = vmatpush1.bf16.xpose.msra.mxu0 %v725
    %729 = vmatprep.subr.bf16.mxu0 0
    %730 = vmatpush1.bf16.xpose.msra.mxu0 0
    %731 = vmatprep.subr.bf16.mxu0 0
    %732 = vmatpush1.bf16.xpose.msra.mxu0 0
    %733 = vmatprep.subr.bf16.mxu0 0
    %734 = vmatpush1.bf16.xpose.msra.mxu0 0
    %735 = vmatprep.subr.bf16.mxu0 0
    %736 = vmatpush1.bf16.xpose.msra.mxu0 0
    %737 = vmatprep.subr.bf16.mxu0 0
    %738 = vmatpush1.bf16.xpose.msra.mxu0 0
    %739 = vmatprep.subr.bf16.mxu0 0
    %740 = vmatpush1.bf16.xpose.msra.mxu0 0
    %741 = vmatprep.subr.bf16.mxu0 0
    %742 = vmatpush1.bf16.xpose.msra.mxu0 0
    %743 = vmatprep.subr.bf16.mxu0 0
    %744 = vmatpush1.bf16.xpose.msra.mxu0 0
    %745 = vmatprep.subr.bf16.mxu0 0
    %746 = vmatpush1.bf16.xpose.msra.mxu0 0
    %747 = vmatprep.subr.bf16.mxu0 0
    %748 = vmatpush1.bf16.xpose.msra.mxu0 0
    %749 = vmatprep.subr.bf16.mxu0 0
    %750 = vmatpush1.bf16.xpose.msra.mxu0 0
    %751 = vmatprep.subr.bf16.mxu0 0
    %752 = vmatpush1.bf16.xpose.msra.mxu0 0
    %753 = vmatprep.subr.bf16.mxu0 0
    %754 = vmatpush1.bf16.xpose.msra.mxu0 0
    %755 = vmatprep.subr.bf16.mxu0 0
    %756 = vmatpush1.bf16.xpose.msra.mxu0 0
    %757 = vmatprep.subr.bf16.mxu0 0
    %758 = vmatpush1.bf16.xpose.msra.mxu0 0
    %759 = vmatprep.mubr.bf16.mxu0 0
    %760 = vmatmul.mubr.bf16.gmra.mrb[0].mxu0 %v722
    %v761 = vpop.f32.mrb[0].mxu0
    %v762 = vadd.f32 %v51, %v761
    %v763 = vpop.f32.mrb[0].mxu0
    %v764 = vpop.f32.mrb[0].mxu0
    %v765 = vpop.f32.mrb[0].mxu0
    %766 = vdwg.mxu0
    %767 = vrot.lane.b32.xlu0 %v175, 112
    %v768 = vpop.permute.xlu0 %767
    %769 = vrot.lane.b32.xlu0 %v229, 80
    %v770 = vpop.permute.xlu0 %769
    %v772 = vsel %vm182, %v768, 0
    %v775 = vsel %vm182, %v770, 0
    %777 = vmatprep.subr.bf16.mxu0 0
    %778 = vmatpush1.bf16.xpose.msra.mxu0 %v775
    %779 = vmatprep.subr.bf16.mxu0 0
    %780 = vmatpush1.bf16.xpose.msra.mxu0 0
    %781 = vmatprep.subr.bf16.mxu0 0
    %782 = vmatpush1.bf16.xpose.msra.mxu0 0
    %783 = vmatprep.subr.bf16.mxu0 0
    %784 = vmatpush1.bf16.xpose.msra.mxu0 0
    %785 = vmatprep.subr.bf16.mxu0 0
    %786 = vmatpush1.bf16.xpose.msra.mxu0 0
    %787 = vmatprep.subr.bf16.mxu0 0
    %788 = vmatpush1.bf16.xpose.msra.mxu0 0
    %789 = vmatprep.subr.bf16.mxu0 0
    %790 = vmatpush1.bf16.xpose.msra.mxu0 0
    %791 = vmatprep.subr.bf16.mxu0 0
    %792 = vmatpush1.bf16.xpose.msra.mxu0 0
    %793 = vmatprep.subr.bf16.mxu0 0
    %794 = vmatpush1.bf16.xpose.msra.mxu0 0
    %795 = vmatprep.subr.bf16.mxu0 0
    %796 = vmatpush1.bf16.xpose.msra.mxu0 0
    %797 = vmatprep.subr.bf16.mxu0 0
    %798 = vmatpush1.bf16.xpose.msra.mxu0 0
    %799 = vmatprep.subr.bf16.mxu0 0
    %800 = vmatpush1.bf16.xpose.msra.mxu0 0
    %801 = vmatprep.subr.bf16.mxu0 0
    %802 = vmatpush1.bf16.xpose.msra.mxu0 0
    %803 = vmatprep.subr.bf16.mxu0 0
    %804 = vmatpush1.bf16.xpose.msra.mxu0 0
    %805 = vmatprep.subr.bf16.mxu0 0
    %806 = vmatpush1.bf16.xpose.msra.mxu0 0
    %807 = vmatprep.subr.bf16.mxu0 0
    %808 = vmatpush1.bf16.xpose.msra.mxu0 0
    %809 = vmatprep.mubr.bf16.mxu0 0
    %810 = vmatmul.mubr.bf16.gmra.mrb[0].mxu0 %v772
    %v811 = vpop.f32.mrb[0].mxu0
    %v812 = vadd.f32 %v52, %v811
    %v813 = vpop.f32.mrb[0].mxu0
    %v814 = vpop.f32.mrb[0].mxu0
    %v815 = vpop.f32.mrb[0].mxu0
    %816 = vdwg.mxu0
    %v817 = vsel %vm182, %v762, -inf
    %818 = vmax.xlane.f32.xlu0 %v817
    %v819 = vpop.xlane.xlu0 %818
    %v820 = vsel %vm182, %v812, -inf
    %821 = vmax.xlane.f32.xlu0 %v820
    %v822 = vpop.xlane.xlu0 %821
    %v823 = vsub.f32 %v762, %v819
    %v824 = vsub.f32 %v812, %v822
    %v825 = vmul.f32 %v823, 1.442695
    %v826 = vpow.pop %v825
    %v827 = vmul.f32 %v824, 1.442695
    %v828 = vpow.pop %v827
    %v829 = vsel %vm182, %v826, 0.0
    %830 = vadd.xlane.f32.xlu0 %v829
    %v831 = vpop.xlane.xlu0 %830
    %v832 = vsel %vm182, %v828, 0.0
    %833 = vadd.xlane.f32.xlu0 %v832
    %v834 = vpop.xlane.xlu0 %833
    %v835 = vrcp.pop %v831
    %v836 = vrcp.pop %v834
    %v837 = vmul.f32 %v826, %v835
    %v838 = vmul.f32 %v828, %v836
    %v839 = vpack.c.bf16 %v837, %v837
    %v840 = vpack.c.bf16 %v838, %v838
    %841 = vrot.lane.b32.xlu0 %v179, 48
    %v842 = vpop.permute.xlu0 %841
    %v844 = vsel %vm182, %v839, 0
    %v847 = vsel %vm307, %v842, 0
    %849 = vmatprep.subr.bf16.mxu0 0
    %850 = vmatpush1.bf16.msra.mxu0 %v847
    %851 = vmatprep.subr.bf16.mxu0 0
    %852 = vmatpush1.bf16.msra.mxu0 0
    %853 = vmatprep.subr.bf16.mxu0 0
    %854 = vmatpush1.bf16.msra.mxu0 0
    %855 = vmatprep.subr.bf16.mxu0 0
    %856 = vmatpush1.bf16.msra.mxu0 0
    %857 = vmatprep.subr.bf16.mxu0 0
    %858 = vmatpush1.bf16.msra.mxu0 0
    %859 = vmatprep.subr.bf16.mxu0 0
    %860 = vmatpush1.bf16.msra.mxu0 0
    %861 = vmatprep.subr.bf16.mxu0 0
    %862 = vmatpush1.bf16.msra.mxu0 0
    %863 = vmatprep.subr.bf16.mxu0 0
    %864 = vmatpush1.bf16.msra.mxu0 0
    %865 = vmatprep.subr.bf16.mxu0 0
    %866 = vmatpush1.bf16.msra.mxu0 0
    %867 = vmatprep.subr.bf16.mxu0 0
    %868 = vmatpush1.bf16.msra.mxu0 0
    %869 = vmatprep.subr.bf16.mxu0 0
    %870 = vmatpush1.bf16.msra.mxu0 0
    %871 = vmatprep.subr.bf16.mxu0 0
    %872 = vmatpush1.bf16.msra.mxu0 0
    %873 = vmatprep.subr.bf16.mxu0 0
    %874 = vmatpush1.bf16.msra.mxu0 0
    %875 = vmatprep.subr.bf16.mxu0 0
    %876 = vmatpush1.bf16.msra.mxu0 0
    %877 = vmatprep.subr.bf16.mxu0 0
    %878 = vmatpush1.bf16.msra.mxu0 0
    %879 = vmatprep.subr.bf16.mxu0 0
    %880 = vmatpush1.bf16.msra.mxu0 0
    %881 = vmatprep.mubr.bf16.mxu0 0
    %882 = vmatmul.mubr.bf16.gmra.mrb[0].mxu0 %v844
    %v883 = vpop.f32.mrb[0].mxu0
    %v884 = vadd.f32 0.0, %v883
    %v885 = vpop.f32.mrb[0].mxu0
    %v886 = vpop.f32.mrb[0].mxu0
    %v887 = vpop.f32.mrb[0].mxu0
    %888 = vdwg.mxu0
    %889 = vrot.lane.b32.xlu0 %v229, 48
    %v890 = vpop.permute.xlu0 %889
    %v892 = vsel %vm182, %v840, 0
    %v895 = vsel %vm307, %v890, 0
    %897 = vmatprep.subr.bf16.mxu0 0
    %898 = vmatpush1.bf16.msra.mxu0 %v895
    %899 = vmatprep.subr.bf16.mxu0 0
    %900 = vmatpush1.bf16.msra.mxu0 0
    %901 = vmatprep.subr.bf16.mxu0 0
    %902 = vmatpush1.bf16.msra.mxu0 0
    %903 = vmatprep.subr.bf16.mxu0 0
    %904 = vmatpush1.bf16.msra.mxu0 0
    %905 = vmatprep.subr.bf16.mxu0 0
    %906 = vmatpush1.bf16.msra.mxu0 0
    %907 = vmatprep.subr.bf16.mxu0 0
    %908 = vmatpush1.bf16.msra.mxu0 0
    %909 = vmatprep.subr.bf16.mxu0 0
    %910 = vmatpush1.bf16.msra.mxu0 0
    %911 = vmatprep.subr.bf16.mxu0 0
    %912 = vmatpush1.bf16.msra.mxu0 0
    %913 = vmatprep.subr.bf16.mxu0 0
    %914 = vmatpush1.bf16.msra.mxu0 0
    %915 = vmatprep.subr.bf16.mxu0 0
    %916 = vmatpush1.bf16.msra.mxu0 0
    %917 = vmatprep.subr.bf16.mxu0 0
    %918 = vmatpush1.bf16.msra.mxu0 0
    %919 = vmatprep.subr.bf16.mxu0 0
    %920 = vmatpush1.bf16.msra.mxu0 0
    %921 = vmatprep.subr.bf16.mxu0 0
    %922 = vmatpush1.bf16.msra.mxu0 0
    %923 = vmatprep.subr.bf16.mxu0 0
    %924 = vmatpush1.bf16.msra.mxu0 0
    %925 = vmatprep.subr.bf16.mxu0 0
    %926 = vmatpush1.bf16.msra.mxu0 0
    %927 = vmatprep.subr.bf16.mxu0 0
    %928 = vmatpush1.bf16.msra.mxu0 0
    %929 = vmatprep.mubr.bf16.mxu0 0
    %930 = vmatmul.mubr.bf16.gmra.mrb[0].mxu0 %v892
    %v931 = vpop.f32.mrb[0].mxu0
    %v932 = vadd.f32 0.0, %v931
    %v933 = vpop.f32.mrb[0].mxu0
    %v934 = vpop.f32.mrb[0].mxu0
    %v935 = vpop.f32.mrb[0].mxu0
    %936 = vdwg.mxu0
    %v937 = vpack.c.bf16 %v932, %v884
    %v938 = vld [vmem:[%s6 + $0x8] sm:$0xf]
    %v940 = vsel %vm182, %v937, 0
    %v943 = vsel %vm307, %v938, 0
    %945 = vmatprep.subr.bf16.mxu0 0
    %946 = vmatpush1.bf16.msra.mxu0 %v943
    %947 = vmatprep.subr.bf16.mxu0 0
    %948 = vmatpush1.bf16.msra.mxu0 0
    %949 = vmatprep.subr.bf16.mxu0 0
    %950 = vmatpush1.bf16.msra.mxu0 0
    %951 = vmatprep.subr.bf16.mxu0 0
    %952 = vmatpush1.bf16.msra.mxu0 0
    %953 = vmatprep.subr.bf16.mxu0 0
    %954 = vmatpush1.bf16.msra.mxu0 0
    %955 = vmatprep.subr.bf16.mxu0 0
    %956 = vmatpush1.bf16.msra.mxu0 0
    %957 = vmatprep.subr.bf16.mxu0 0
    %958 = vmatpush1.bf16.msra.mxu0 0
    %959 = vmatprep.subr.bf16.mxu0 0
    %960 = vmatpush1.bf16.msra.mxu0 0
    %961 = vmatprep.subr.bf16.mxu0 0
    %962 = vmatpush1.bf16.msra.mxu0 0
    %963 = vmatprep.subr.bf16.mxu0 0
    %964 = vmatpush1.bf16.msra.mxu0 0
    %965 = vmatprep.subr.bf16.mxu0 0
    %966 = vmatpush1.bf16.msra.mxu0 0
    %967 = vmatprep.subr.bf16.mxu0 0
    %968 = vmatpush1.bf16.msra.mxu0 0
    %969 = vmatprep.subr.bf16.mxu0 0
    %970 = vmatpush1.bf16.msra.mxu0 0
    %971 = vmatprep.subr.bf16.mxu0 0
    %972 = vmatpush1.bf16.msra.mxu0 0
    %973 = vmatprep.subr.bf16.mxu0 0
    %974 = vmatpush1.bf16.msra.mxu0 0
    %975 = vmatprep.subr.bf16.mxu0 0
    %976 = vmatpush1.bf16.msra.mxu0 0
    %977 = vmatprep.mubr.bf16.mxu0 0
    %978 = vmatmul.mubr.bf16.gmra.mrb[0].mxu0 %v940
    %v979 = vpop.f32.mrb[0].mxu0
    %v980 = vadd.f32 0.0, %v979
    %v981 = vpop.f32.mrb[0].mxu0
    %v982 = vpop.f32.mrb[0].mxu0
    %v983 = vadd.f32 0.0, %v982
    %v984 = vpop.f32.mrb[0].mxu0
    %985 = vdwg.mxu0
    %v986 = vadd.f32 %v711, %v980
    %v987 = vadd.f32 %v714, %v983
    %988 = vrot.lane.b32.xlu0 %v174, 104
    %v989 = vpop.permute.xlu0 %988
    %990 = vrot.lane.b32.xlu0 %v179, 72
    %v991 = vpop.permute.xlu0 %990
    %v993 = vsel %vm182, %v989, 0
    %v996 = vsel %vm182, %v991, 0
    %998 = vmatprep.subr.bf16.mxu0 0
    %999 = vmatpush1.bf16.xpose.msra.mxu0 %v996
    %1000 = vmatprep.subr.bf16.mxu0 0
    %1001 = vmatpush1.bf16.xpose.msra.mxu0 0
    %1002 = vmatprep.subr.bf16.mxu0 0
    %1003 = vmatpush1.bf16.xpose.msra.mxu0 0
    %1004 = vmatprep.subr.bf16.mxu0 0
    %1005 = vmatpush1.bf16.xpose.msra.mxu0 0
    %1006 = vmatprep.subr.bf16.mxu0 0
    %1007 = vmatpush1.bf16.xpose.msra.mxu0 0
    %1008 = vmatprep.subr.bf16.mxu0 0
    %1009 = vmatpush1.bf16.xpose.msra.mxu0 0
    %1010 = vmatprep.subr.bf16.mxu0 0
    %1011 = vmatpush1.bf16.xpose.msra.mxu0 0
    %1012 = vmatprep.subr.bf16.mxu0 0
    %1013 = vmatpush1.bf16.xpose.msra.mxu0 0
    %1014 = vmatprep.subr.bf16.mxu0 0
    %1015 = vmatpush1.bf16.xpose.msra.mxu0 0
    %1016 = vmatprep.subr.bf16.mxu0 0
    %1017 = vmatpush1.bf16.xpose.msra.mxu0 0
    %1018 = vmatprep.subr.bf16.mxu0 0
    %1019 = vmatpush1.bf16.xpose.msra.mxu0 0
    %1020 = vmatprep.subr.bf16.mxu0 0
    %1021 = vmatpush1.bf16.xpose.msra.mxu0 0
    %1022 = vmatprep.subr.bf16.mxu0 0
    %1023 = vmatpush1.bf16.xpose.msra.mxu0 0
    %1024 = vmatprep.subr.bf16.mxu0 0
    %1025 = vmatpush1.bf16.xpose.msra.mxu0 0
    %1026 = vmatprep.subr.bf16.mxu0 0
    %1027 = vmatpush1.bf16.xpose.msra.mxu0 0
    %1028 = vmatprep.subr.bf16.mxu0 0
    %1029 = vmatpush1.bf16.xpose.msra.mxu0 0
    %1030 = vmatprep.mubr.bf16.mxu0 0
    %1031 = vmatmul.mubr.bf16.gmra.mrb[0].mxu0 %v993
    %v1032 = vpop.f32.mrb[0].mxu0
    %v1033 = vadd.f32 %v51, %v1032
    %v1034 = vpop.f32.mrb[0].mxu0
    %v1035 = vpop.f32.mrb[0].mxu0
    %v1036 = vpop.f32.mrb[0].mxu0
    %1037 = vdwg.mxu0
    %1038 = vrot.lane.b32.xlu0 %v175, 104
    %v1039 = vpop.permute.xlu0 %1038
    %1040 = vrot.lane.b32.xlu0 %v229, 72
    %v1041 = vpop.permute.xlu0 %1040
    %v1043 = vsel %vm182, %v1039, 0
    %v1046 = vsel %vm182, %v1041, 0
    %1048 = vmatprep.subr.bf16.mxu0 0
    %1049 = vmatpush1.bf16.xpose.msra.mxu0 %v1046
    %1050 = vmatprep.subr.bf16.mxu0 0
    %1051 = vmatpush1.bf16.xpose.msra.mxu0 0
    %1052 = vmatprep.subr.bf16.mxu0 0
    %1053 = vmatpush1.bf16.xpose.msra.mxu0 0
    %1054 = vmatprep.subr.bf16.mxu0 0
    %1055 = vmatpush1.bf16.xpose.msra.mxu0 0
    %1056 = vmatprep.subr.bf16.mxu0 0
    %1057 = vmatpush1.bf16.xpose.msra.mxu0 0
    %1058 = vmatprep.subr.bf16.mxu0 0
    %1059 = vmatpush1.bf16.xpose.msra.mxu0 0
    %1060 = vmatprep.subr.bf16.mxu0 0
    %1061 = vmatpush1.bf16.xpose.msra.mxu0 0
    %1062 = vmatprep.subr.bf16.mxu0 0
    %1063 = vmatpush1.bf16.xpose.msra.mxu0 0
    %1064 = vmatprep.subr.bf16.mxu0 0
    %1065 = vmatpush1.bf16.xpose.msra.mxu0 0
    %1066 = vmatprep.subr.bf16.mxu0 0
    %1067 = vmatpush1.bf16.xpose.msra.mxu0 0
    %1068 = vmatprep.subr.bf16.mxu0 0
    %1069 = vmatpush1.bf16.xpose.msra.mxu0 0
    %1070 = vmatprep.subr.bf16.mxu0 0
    %1071 = vmatpush1.bf16.xpose.msra.mxu0 0
    %1072 = vmatprep.subr.bf16.mxu0 0
    %1073 = vmatpush1.bf16.xpose.msra.mxu0 0
    %1074 = vmatprep.subr.bf16.mxu0 0
    %1075 = vmatpush1.bf16.xpose.msra.mxu0 0
    %1076 = vmatprep.subr.bf16.mxu0 0
    %1077 = vmatpush1.bf16.xpose.msra.mxu0 0
    %1078 = vmatprep.subr.bf16.mxu0 0
    %1079 = vmatpush1.bf16.xpose.msra.mxu0 0
    %1080 = vmatprep.mubr.bf16.mxu0 0
    %1081 = vmatmul.mubr.bf16.gmra.mrb[0].mxu0 %v1043
    %v1082 = vpop.f32.mrb[0].mxu0
    %v1083 = vadd.f32 %v52, %v1082
    %v1084 = vpop.f32.mrb[0].mxu0
    %v1085 = vpop.f32.mrb[0].mxu0
    %v1086 = vpop.f32.mrb[0].mxu0
    %1087 = vdwg.mxu0
    %v1088 = vsel %vm182, %v1033, -inf
    %1089 = vmax.xlane.f32.xlu0 %v1088
    %v1090 = vpop.xlane.xlu0 %1089
    %v1091 = vsel %vm182, %v1083, -inf
    %1092 = vmax.xlane.f32.xlu0 %v1091
    %v1093 = vpop.xlane.xlu0 %1092
    %v1094 = vsub.f32 %v1033, %v1090
    %v1095 = vsub.f32 %v1083, %v1093
    %v1096 = vmul.f32 %v1094, 1.442695
    %v1097 = vpow.pop %v1096
    %v1098 = vmul.f32 %v1095, 1.442695
    %v1099 = vpow.pop %v1098
    %v1100 = vsel %vm182, %v1097, 0.0
    %1101 = vadd.xlane.f32.xlu0 %v1100
    %v1102 = vpop.xlane.xlu0 %1101
    %v1103 = vsel %vm182, %v1099, 0.0
    %1104 = vadd.xlane.f32.xlu0 %v1103
    %v1105 = vpop.xlane.xlu0 %1104
    %v1106 = vrcp.pop %v1102
    %v1107 = vrcp.pop %v1105
    %v1108 = vmul.f32 %v1097, %v1106
    %v1109 = vmul.f32 %v1099, %v1107
    %v1110 = vpack.c.bf16 %v1108, %v1108
    %v1111 = vpack.c.bf16 %v1109, %v1109
    %1112 = vrot.lane.b32.xlu0 %v179, 40
    %v1113 = vpop.permute.xlu0 %1112
    %v1115 = vsel %vm182, %v1110, 0
    %v1118 = vsel %vm307, %v1113, 0
    %1120 = vmatprep.subr.bf16.mxu0 0
    %1121 = vmatpush1.bf16.msra.mxu0 %v1118
    %1122 = vmatprep.subr.bf16.mxu0 0
    %1123 = vmatpush1.bf16.msra.mxu0 0
    %1124 = vmatprep.subr.bf16.mxu0 0
    %1125 = vmatpush1.bf16.msra.mxu0 0
    %1126 = vmatprep.subr.bf16.mxu0 0
    %1127 = vmatpush1.bf16.msra.mxu0 0
    %1128 = vmatprep.subr.bf16.mxu0 0
    %1129 = vmatpush1.bf16.msra.mxu0 0
    %1130 = vmatprep.subr.bf16.mxu0 0
    %1131 = vmatpush1.bf16.msra.mxu0 0
    %1132 = vmatprep.subr.bf16.mxu0 0
    %1133 = vmatpush1.bf16.msra.mxu0 0
    %1134 = vmatprep.subr.bf16.mxu0 0
    %1135 = vmatpush1.bf16.msra.mxu0 0
    %1136 = vmatprep.subr.bf16.mxu0 0
    %1137 = vmatpush1.bf16.msra.mxu0 0
    %1138 = vmatprep.subr.bf16.mxu0 0
    %1139 = vmatpush1.bf16.msra.mxu0 0
    %1140 = vmatprep.subr.bf16.mxu0 0
    %1141 = vmatpush1.bf16.msra.mxu0 0
    %1142 = vmatprep.subr.bf16.mxu0 0
    %1143 = vmatpush1.bf16.msra.mxu0 0
    %1144 = vmatprep.subr.bf16.mxu0 0
    %1145 = vmatpush1.bf16.msra.mxu0 0
    %1146 = vmatprep.subr.bf16.mxu0 0
    %1147 = vmatpush1.bf16.msra.mxu0 0
    %1148 = vmatprep.subr.bf16.mxu0 0
    %1149 = vmatpush1.bf16.msra.mxu0 0
    %1150 = vmatprep.subr.bf16.mxu0 0
    %1151 = vmatpush1.bf16.msra.mxu0 0
    %1152 = vmatprep.mubr.bf16.mxu0 0
    %1153 = vmatmul.mubr.bf16.gmra.mrb[0].mxu0 %v1115
    %v1154 = vpop.f32.mrb[0].mxu0
    %v1155 = vadd.f32 0.0, %v1154
    %v1156 = vpop.f32.mrb[0].mxu0
    %v1157 = vpop.f32.mrb[0].mxu0
    %v1158 = vpop.f32.mrb[0].mxu0
    %1159 = vdwg.mxu0
    %1160 = vrot.lane.b32.xlu0 %v229, 40
    %v1161 = vpop.permute.xlu0 %1160
    %v1163 = vsel %vm182, %v1111, 0
    %v1166 = vsel %vm307, %v1161, 0
    %1168 = vmatprep.subr.bf16.mxu0 0
    %1169 = vmatpush1.bf16.msra.mxu0 %v1166
    %1170 = vmatprep.subr.bf16.mxu0 0
    %1171 = vmatpush1.bf16.msra.mxu0 0
    %1172 = vmatprep.subr.bf16.mxu0 0
    %1173 = vmatpush1.bf16.msra.mxu0 0
    %1174 = vmatprep.subr.bf16.mxu0 0
    %1175 = vmatpush1.bf16.msra.mxu0 0
    %1176 = vmatprep.subr.bf16.mxu0 0
    %1177 = vmatpush1.bf16.msra.mxu0 0
    %1178 = vmatprep.subr.bf16.mxu0 0
    %1179 = vmatpush1.bf16.msra.mxu0 0
    %1180 = vmatprep.subr.bf16.mxu0 0
    %1181 = vmatpush1.bf16.msra.mxu0 0
    %1182 = vmatprep.subr.bf16.mxu0 0
    %1183 = vmatpush1.bf16.msra.mxu0 0
    %1184 = vmatprep.subr.bf16.mxu0 0
    %1185 = vmatpush1.bf16.msra.mxu0 0
    %1186 = vmatprep.subr.bf16.mxu0 0
    %1187 = vmatpush1.bf16.msra.mxu0 0
    %1188 = vmatprep.subr.bf16.mxu0 0
    %1189 = vmatpush1.bf16.msra.mxu0 0
    %1190 = vmatprep.subr.bf16.mxu0 0
    %1191 = vmatpush1.bf16.msra.mxu0 0
    %1192 = vmatprep.subr.bf16.mxu0 0
    %1193 = vmatpush1.bf16.msra.mxu0 0
    %1194 = vmatprep.subr.bf16.mxu0 0
    %1195 = vmatpush1.bf16.msra.mxu0 0
    %1196 = vmatprep.subr.bf16.mxu0 0
    %1197 = vmatpush1.bf16.msra.mxu0 0
    %1198 = vmatprep.subr.bf16.mxu0 0
    %1199 = vmatpush1.bf16.msra.mxu0 0
    %1200 = vmatprep.mubr.bf16.mxu0 0
    %1201 = vmatmul.mubr.bf16.gmra.mrb[0].mxu0 %v1163
    %v1202 = vpop.f32.mrb[0].mxu0
    %v1203 = vadd.f32 0.0, %v1202
    %v1204 = vpop.f32.mrb[0].mxu0
    %v1205 = vpop.f32.mrb[0].mxu0
    %v1206 = vpop.f32.mrb[0].mxu0
    %1207 = vdwg.mxu0
    %v1208 = vpack.c.bf16 %v1203, %v1155
    %v1209 = vld [vmem:[%s6 + $0xc] sm:$0xf]
    %v1211 = vsel %vm182, %v1208, 0
    %v1214 = vsel %vm307, %v1209, 0
    %1216 = vmatprep.subr.bf16.mxu0 0
    %1217 = vmatpush1.bf16.msra.mxu0 %v1214
    %1218 = vmatprep.subr.bf16.mxu0 0
    %1219 = vmatpush1.bf16.msra.mxu0 0
    %1220 = vmatprep.subr.bf16.mxu0 0
    %1221 = vmatpush1.bf16.msra.mxu0 0
    %1222 = vmatprep.subr.bf16.mxu0 0
    %1223 = vmatpush1.bf16.msra.mxu0 0
    %1224 = vmatprep.subr.bf16.mxu0 0
    %1225 = vmatpush1.bf16.msra.mxu0 0
    %1226 = vmatprep.subr.bf16.mxu0 0
    %1227 = vmatpush1.bf16.msra.mxu0 0
    %1228 = vmatprep.subr.bf16.mxu0 0
    %1229 = vmatpush1.bf16.msra.mxu0 0
    %1230 = vmatprep.subr.bf16.mxu0 0
    %1231 = vmatpush1.bf16.msra.mxu0 0
    %1232 = vmatprep.subr.bf16.mxu0 0
    %1233 = vmatpush1.bf16.msra.mxu0 0
    %1234 = vmatprep.subr.bf16.mxu0 0
    %1235 = vmatpush1.bf16.msra.mxu0 0
    %1236 = vmatprep.subr.bf16.mxu0 0
    %1237 = vmatpush1.bf16.msra.mxu0 0
    %1238 = vmatprep.subr.bf16.mxu0 0
    %1239 = vmatpush1.bf16.msra.mxu0 0
    %1240 = vmatprep.subr.bf16.mxu0 0
    %1241 = vmatpush1.bf16.msra.mxu0 0
    %1242 = vmatprep.subr.bf16.mxu0 0
    %1243 = vmatpush1.bf16.msra.mxu0 0
    %1244 = vmatprep.subr.bf16.mxu0 0
    %1245 = vmatpush1.bf16.msra.mxu0 0
    %1246 = vmatprep.subr.bf16.mxu0 0
    %1247 = vmatpush1.bf16.msra.mxu0 0
    %1248 = vmatprep.mubr.bf16.mxu0 0
    %1249 = vmatmul.mubr.bf16.gmra.mrb[0].mxu0 %v1211
    %v1250 = vpop.f32.mrb[0].mxu0
    %v1251 = vadd.f32 0.0, %v1250
    %v1252 = vpop.f32.mrb[0].mxu0
    %v1253 = vpop.f32.mrb[0].mxu0
    %v1254 = vadd.f32 0.0, %v1253
    %v1255 = vpop.f32.mrb[0].mxu0
    %1256 = vdwg.mxu0
    %v1257 = vadd.f32 %v986, %v1251
    %v1258 = vadd.f32 %v987, %v1254
    %v1259 = vld [vmem:[%s7] sm:$0x1]
    %v1261 = vlaneseq
    %v1262 = vshrl.u32 %v1261, 7
    %v1263 = vsub.s32 0, %v1262
    %v1264 = vrot.slane %v1259, %v1263
    %v1266 = vadd.f32 %v1257, %v1264
    %v1267 = vadd.f32 %v1258, %v1264
    %v1268 = vadd.f32 %v49, %v1266
    %v1269 = vadd.f32 %v50, %v1267
    %v1270 = vld [vmem:[%s8] sm:$0x1]
    %v1271 = vld [vmem:[%s9] sm:$0x1]
    %v1272 = vsel %vm55, %v1268, 0.0
    %1273 = vadd.xlane.f32.xlu0 %v1272
    %v1274 = vpop.xlane.xlu0 %1273
    %v1275 = vsel %vm55, %v1269, 0.0
    %1276 = vadd.xlane.f32.xlu0 %v1275
    %v1277 = vpop.xlane.xlu0 %1276
    %v1278 = vmul.f32 %v1274, %v62
    %v1279 = vmul.f32 %v1277, %v62
    %v1280 = vsub.f32 %v1268, %v1278
    %v1281 = vsub.f32 %v1269, %v1279
    %v1282 = vmul.f32 %v1280, %v1280
    %v1283 = vmul.f32 %v1281, %v1281
    %v1284 = vsel %vm55, %v1282, 0.0
    %1285 = vadd.xlane.f32.xlu0 %v1284
    %v1286 = vpop.xlane.xlu0 %1285
    %v1287 = vsel %vm55, %v1283, 0.0
    %1288 = vadd.xlane.f32.xlu0 %v1287
    %v1289 = vpop.xlane.xlu0 %1288
    %v1290 = vmul.f32 %v1286, %v62
    %v1291 = vmul.f32 %v1289, %v62
    %v1292 = vadd.f32 %v1290, 1e-05
    %v1293 = vadd.f32 %v1291, 1e-05
    %v1294 = vrsqrt.pop %v1292
    %v1295 = vrsqrt.pop %v1293
    %v1296 = vmul.f32 %v1280, %v1294
    %v1297 = vmul.f32 %v1281, %v1295
    %v1299 = vlaneseq
    %v1300 = vshrl.u32 %v1299, 7
    %v1301 = vsub.s32 0, %v1300
    %v1302 = vrot.slane %v1270, %v1301
    %v1304 = vmul.f32 %v1296, %v1302
    %v1305 = vmul.f32 %v1297, %v1302
    %v1307 = vlaneseq
    %v1308 = vshrl.u32 %v1307, 7
    %v1309 = vsub.s32 0, %v1308
    %v1310 = vrot.slane %v1271, %v1309
    %v1312 = vadd.f32 %v1304, %v1310
    %v1313 = vadd.f32 %v1305, %v1310
    %v1314 = vpack.c.bf16 %v1313, %v1312
    %v1315 = vld [vmem:[%s10] sm:$0xf]
    %v1316 = vld [vmem:[%s10 + $0x4] sm:$0xf]
    %v1317 = vld [vmem:[%s10 + $0x8] sm:$0xf]
    %v1318 = vld [vmem:[%s10 + $0xc] sm:$0xf]
    %v1319 = vld [vmem:[%s11] sm:$0x1]
    %v1321 = vlaneseq
    %v1322 = vshrl.u32 %v1321, 7
    %v1323 = vsub.s32 0, %v1322
    %v1324 = vrot.slane %v1319, %v1323
    %v1330 = vunpack.c.l.b16 %v1315
    %v1331 = vunpack.c.l.b16 %v1316
    %v1332 = vunpack.c.l.b16 %v1317
    %v1333 = vunpack.c.l.b16 %v1318
    %v1334 = vpack.c.b16 %v1331, %v1330
    %v1335 = vpack.c.b16 %v1333, %v1332
    %v1339 = vsel %vm55, %v1314, 0
    %1341 = vmatprep.subr.bf16.mxu0 0
    %1342 = vmatpush1.bf16.msra.mxu0 %v1334
    %1343 = vmatprep.subr.bf16.mxu0 0
    %1344 = vmatpush1.bf16.msra.mxu0 %v1335
    %1345 = vmatprep.subr.bf16.mxu0 0
    %1346 = vmatpush1.bf16.msra.mxu0 0
    %1347 = vmatprep.subr.bf16.mxu0 0
    %1348 = vmatpush1.bf16.msra.mxu0 0
    %1349 = vmatprep.subr.bf16.mxu0 0
    %1350 = vmatpush1.bf16.msra.mxu0 0
    %1351 = vmatprep.subr.bf16.mxu0 0
    %1352 = vmatpush1.bf16.msra.mxu0 0
    %1353 = vmatprep.subr.bf16.mxu0 0
    %1354 = vmatpush1.bf16.msra.mxu0 0
    %1355 = vmatprep.subr.bf16.mxu0 0
    %1356 = vmatpush1.bf16.msra.mxu0 0
    %1357 = vmatprep.subr.bf16.mxu0 0
    %1358 = vmatpush1.bf16.msra.mxu0 0
    %1359 = vmatprep.subr.bf16.mxu0 0
    %1360 = vmatpush1.bf16.msra.mxu0 0
    %1361 = vmatprep.subr.bf16.mxu0 0
    %1362 = vmatpush1.bf16.msra.mxu0 0
    %1363 = vmatprep.subr.bf16.mxu0 0
    %1364 = vmatpush1.bf16.msra.mxu0 0
    %1365 = vmatprep.subr.bf16.mxu0 0
    %1366 = vmatpush1.bf16.msra.mxu0 0
    %1367 = vmatprep.subr.bf16.mxu0 0
    %1368 = vmatpush1.bf16.msra.mxu0 0
    %1369 = vmatprep.subr.bf16.mxu0 0
    %1370 = vmatpush1.bf16.msra.mxu0 0
    %1371 = vmatprep.subr.bf16.mxu0 0
    %1372 = vmatpush1.bf16.msra.mxu0 0
    %1373 = vmatprep.mubr.bf16.mxu0 0
    %1374 = vmatmul.mubr.bf16.gmra.mrb[0].mxu0 %v1339
    %v1375 = vpop.f32.mrb[0].mxu0
    %v1376 = vadd.f32 %v1324, %v1375
    %v1377 = vpop.f32.mrb[0].mxu0
    %v1378 = vpop.f32.mrb[0].mxu0
    %v1379 = vadd.f32 %v1324, %v1378
    %v1380 = vpop.f32.mrb[0].mxu0
    %1381 = vdwg.mxu0
    %v1382 = vmul.f32 %v1376, 1.702
    %v1383 = vmul.f32 %v1379, 1.702
    %v1384 = vxor.u32 %v1382, 2147483648
    %v1385 = vxor.u32 %v1383, 2147483648
    %v1386 = vmul.f32 %v1384, 1.442695
    %v1387 = vpow.pop %v1386
    %v1388 = vmul.f32 %v1385, 1.442695
    %v1389 = vpow.pop %v1388
    %v1390 = vadd.f32 %v1387, 1.0
    %v1391 = vadd.f32 %v1389, 1.0
    %v1392 = vrcp.pop %v1390
    %v1393 = vmul.f32 1.0, %v1392
    %v1394 = vrcp.pop %v1391
    %v1395 = vmul.f32 1.0, %v1394
    %v1396 = vmul.f32 %v1376, %v1393
    %v1397 = vmul.f32 %v1379, %v1395
    %v1398 = vpack.c.bf16 %v1397, %v1396
    %v1399 = vld [vmem:[%s12] sm:$0xf]
    %v1400 = vld [vmem:[%s12 + $0x4] sm:$0xf]
    %v1401 = vld [vmem:[%s12 + $0x8] sm:$0xf]
    %v1402 = vld [vmem:[%s12 + $0xc] sm:$0xf]
    %v1403 = vld [vmem:[%s12 + $0x10] sm:$0xf]
    %v1404 = vld [vmem:[%s12 + $0x14] sm:$0xf]
    %v1405 = vld [vmem:[%s12 + $0x18] sm:$0xf]
    %v1406 = vld [vmem:[%s12 + $0x1c] sm:$0xf]
    %v1407 = vld [vmem:[%s12 + $0x20] sm:$0xf]
    %v1408 = vld [vmem:[%s12 + $0x24] sm:$0xf]
    %v1409 = vld [vmem:[%s12 + $0x28] sm:$0xf]
    %v1410 = vld [vmem:[%s12 + $0x2c] sm:$0xf]
    %v1411 = vld [vmem:[%s12 + $0x30] sm:$0xf]
    %v1412 = vld [vmem:[%s12 + $0x34] sm:$0xf]
    %v1413 = vld [vmem:[%s12 + $0x38] sm:$0xf]
    %v1414 = vld [vmem:[%s12 + $0x3c] sm:$0xf]
    %v1415 = vld [vmem:[%s13] sm:$0x1]
    %v1417 = vlaneseq
    %v1418 = vshrl.u32 %v1417, 7
    %v1419 = vsub.s32 0, %v1418
    %v1420 = vrot.slane %v1415, %v1419
    %v1438 = vunpack.c.l.b16 %v1399
    %v1439 = vunpack.c.l.b16 %v1400
    %v1440 = vunpack.c.l.b16 %v1401
    %v1441 = vunpack.c.l.b16 %v1402
    %v1442 = vunpack.c.l.b16 %v1403
    %v1443 = vunpack.c.l.b16 %v1404
    %v1444 = vunpack.c.l.b16 %v1405
    %v1445 = vunpack.c.l.b16 %v1406
    %v1446 = vunpack.c.l.b16 %v1407
    %v1447 = vunpack.c.l.b16 %v1408
    %v1448 = vunpack.c.l.b16 %v1409
    %v1449 = vunpack.c.l.b16 %v1410
    %v1450 = vunpack.c.l.b16 %v1411
    %v1451 = vunpack.c.l.b16 %v1412
    %v1452 = vunpack.c.l.b16 %v1413
    %v1453 = vunpack.c.l.b16 %v1414
    %v1454 = vpack.c.b16 %v1439, %v1438
    %v1455 = vpack.c.b16 %v1441, %v1440
    %v1456 = vpack.c.b16 %v1443, %v1442
    %v1457 = vpack.c.b16 %v1445, %v1444
    %v1458 = vpack.c.b16 %v1447, %v1446
    %v1459 = vpack.c.b16 %v1449, %v1448
    %v1460 = vpack.c.b16 %v1451, %v1450
    %v1461 = vpack.c.b16 %v1453, %v1452
    %1470 = vmatprep.subr.bf16.mxu0 0
    %1471 = vmatpush1.bf16.msra.mxu0 %v1454
    %1472 = vmatprep.subr.bf16.mxu0 0
    %1473 = vmatpush1.bf16.msra.mxu0 %v1455
    %1474 = vmatprep.subr.bf16.mxu0 0
    %1475 = vmatpush1.bf16.msra.mxu0 %v1456
    %1476 = vmatprep.subr.bf16.mxu0 0
    %1477 = vmatpush1.bf16.msra.mxu0 %v1457
    %1478 = vmatprep.subr.bf16.mxu0 0
    %1479 = vmatpush1.bf16.msra.mxu0 %v1458
    %1480 = vmatprep.subr.bf16.mxu0 0
    %1481 = vmatpush1.bf16.msra.mxu0 %v1459
    %1482 = vmatprep.subr.bf16.mxu0 0
    %1483 = vmatpush1.bf16.msra.mxu0 %v1460
    %1484 = vmatprep.subr.bf16.mxu0 0
    %1485 = vmatpush1.bf16.msra.mxu0 %v1461
    %1486 = vmatprep.subr.bf16.mxu0 0
    %1487 = vmatpush1.bf16.msra.mxu0 0
    %1488 = vmatprep.subr.bf16.mxu0 0
    %1489 = vmatpush1.bf16.msra.mxu0 0
    %1490 = vmatprep.subr.bf16.mxu0 0
    %1491 = vmatpush1.bf16.msra.mxu0 0
    %1492 = vmatprep.subr.bf16.mxu0 0
    %1493 = vmatpush1.bf16.msra.mxu0 0
    %1494 = vmatprep.subr.bf16.mxu0 0
    %1495 = vmatpush1.bf16.msra.mxu0 0
    %1496 = vmatprep.subr.bf16.mxu0 0
    %1497 = vmatpush1.bf16.msra.mxu0 0
    %1498 = vmatprep.subr.bf16.mxu0 0
    %1499 = vmatpush1.bf16.msra.mxu0 0
    %1500 = vmatprep.subr.bf16.mxu0 0
    %1501 = vmatpush1.bf16.msra.mxu0 0
    %1502 = vmatprep.mubr.bf16.mxu0 0
    %1503 = vmatmul.mubr.bf16.gmra.mrb[0].mxu0 %v1398
    %v1504 = vpop.f32.mrb[0].mxu0
    %v1505 = vadd.f32 %v1420, %v1504
    %v1506 = vpop.f32.mrb[0].mxu0
    %v1507 = vpop.f32.mrb[0].mxu0
    %v1508 = vadd.f32 %v1420, %v1507
    %v1509 = vpop.f32.mrb[0].mxu0
    %1510 = vdwg.mxu0
    %v1511 = vadd.f32 %v1268, %v1505
    %v1512 = vadd.f32 %v1269, %v1508
    %1513 = vst.msk [vmem:[#allocation2] sm:$0xff] %vm55, %v1511
    %1514 = vst.msk [vmem:[#allocation2 + $0x8] sm:$0xff] %vm55, %v1512
    // Predicated region
    $region58: #{tpu_custom_call.1} parent=1 // pred_check
      _
    $region59: #{tpu_custom_call.1} parent=1 // pred_check_branch
      %1516 = sbr.rel (0) target = $region61
    $region60: #{tpu_custom_call.1} parent=1 // pred_region
      %s1518 = ssub.s32 256, 256
      %1519 = vsyncadd [#allocation3], %s1518
      %s1520 = sshll.u32 [#allocation2], 4
      %s1521 = int_to_ptr.vmem [resolvable:$true] %s1520
      %1526 = dma.vmem_to_hbm [thread:$0]  %s1521, 256, %s14, [#allocation3], 128, 128, 8
    $region61: #{tpu_custom_call.1} parent=1 // pred_fallthru
      _
    // Predicated region
    $region62: #{tpu_custom_call.1} parent=1 // pred_check
      _
    $region63: #{tpu_custom_call.1} parent=1 // pred_check_branch
      %1528 = sbr.rel (0) target = $region65
    $region64: #{tpu_custom_call.1} parent=1 // pred_region
      %1529 = dma.done [#allocation3], 256
    $region65: #{tpu_custom_call.1} parent=1 // pred_fallthru
      _
    %1530 = vsyncpa [#allocation3], 1

</llo_original>
